<compile_context>
chip_gen: v6e
topology: v6e:2x2x1
jax: 0.10.0
libtpu: 0.0.40
codegen_flags: <defaults>
</compile_context>

<pallas_src>
import functools
import math

import jax
import jax.numpy as jnp
from jax.experimental import pallas as pl
from jax.experimental.pallas import tpu as pltpu

CFG = dict(vocab=128, hidden=32, heads=4, layers=2, intermediate=128,
           max_pos=16, type_vocab=2, classes=6)
LN_EPS = 1e-12
CLS_PAD = 128            # lane-dense classifier output width (real classes sliced outside)


# ----------------------------------------------------------------------------
# In-kernel helpers
# ----------------------------------------------------------------------------
def _mm(a, w):
    """bf16 MXU matmul with f32 accumulation."""
    return jnp.dot(a.astype(jnp.bfloat16), w.astype(jnp.bfloat16),
                   preferred_element_type=jnp.float32)


def _ln(x, g, b, eps=LN_EPS):
    m = jnp.mean(x, axis=-1, keepdims=True)
    v = jnp.mean(jnp.square(x - m), axis=-1, keepdims=True)
    return (x - m) * jax.lax.rsqrt(v + eps) * g + b


# ----------------------------------------------------------------------------
# Single fused kernel: embeddings-LN + L encoder layers + pooler + classifier
# grid = (num_layers,) ; residual stream kept in VMEM scratch across layers.
# ----------------------------------------------------------------------------
def _bert_kernel(emb_ref, bias_ref, embg_ref, embb_ref,
                 wqkv_ref, bqkv_ref, wo_ref, bo_ref, ln1g_ref, ln1b_ref,
                 w1_ref, b1_ref, w2_ref, b2_ref, ln2g_ref, ln2b_ref,
                 pw_ref, pb_ref, cw_ref, cb_ref,
                 logits_ref, x_sc, *, B, S, NH, HD):
    H = NH * HD
    BS = B * S
    l = pl.program_id(0)
    n_layers = pl.num_programs(0)

    # Layer 0 also performs the embedding layernorm (no separate launch); the
    # residual stream stays resident in VMEM scratch for the whole encoder.
    @pl.when(l == 0)
    def _():
        x_sc[...] = _ln(emb_ref[...], embg_ref[...], embb_ref[...])

    x = x_sc[...]                                               # (BS, H) f32 residual

    # ---- fused QKV projection: a single (H, 3H) bf16 matmul ----
    qkv = _mm(x, wqkv_ref[...]) + bqkv_ref[...]                 # (BS, 3H) f32

    bias = bias_ref[...][:, None, :]                            # (B, 1, S) precomputed f32
    scale = 1.0 / math.sqrt(HD)

    # Per-head scores / softmax / context (K=HD matmuls are inherent to MHA at this
    # head_dim); contexts are concatenated head-major so the output projection is a
    # SINGLE (BS, H) @ (H, H) matmul with K = H.
    ctx = []
    for h in range(NH):
        qh = qkv[:, h * HD:(h + 1) * HD].reshape(B, S, HD)
        kh = qkv[:, H + h * HD:H + (h + 1) * HD].reshape(B, S, HD)
        vh = qkv[:, 2 * H + h * HD:2 * H + (h + 1) * HD].reshape(B, S, HD)
        s = jnp.einsum("bqd,bkd->bqk",
                       qh.astype(jnp.bfloat16), kh.astype(jnp.bfloat16),
                       preferred_element_type=jnp.float32) * scale + bias
        m = jnp.max(s, axis=-1, keepdims=True)
        p = jnp.exp(s - m)
        p = p * pl.reciprocal(jnp.sum(p, axis=-1, keepdims=True), approx=True)
        ch = jnp.einsum("bqk,bkd->bqd",
                        p.astype(jnp.bfloat16), vh.astype(jnp.bfloat16),
                        preferred_element_type=jnp.float32)     # (B, S, HD)
        ctx.append(ch.reshape(BS, HD))
    ctx = jnp.concatenate(ctx, axis=-1)                         # (BS, H), head-major columns

    # ---- single full-Wo output projection + residual + layernorm (fused) ----
    attn = _mm(ctx, wo_ref[...]) + bo_ref[...]
    x = _ln(attn + x, ln1g_ref[...], ln1b_ref[...])

    # ---- FFN (w1 -> GELU -> w2) + residual + layernorm (fused) ----
    h1 = _mm(x, w1_ref[...]) + b1_ref[...]
    # TODO(synk): HF BERT uses exact erf GELU; tanh approximation kept for robust lowering.
    h1 = jax.nn.gelu(h1, approximate=True)
    h2 = _mm(h1, w2_ref[...]) + b2_ref[...]
    x = _ln(h2 + x, ln2g_ref[...], ln2b_ref[...])

    x_sc[...] = x

    # ---- last layer step: fused pooler tanh(W·CLS+b) + Dropout(0.3)[identity at eval]
    #      + Linear(H, 6) into a lane-dense padded (B, 128) logits block ----
    @pl.when(l == n_layers - 1)
    def _():
        cls = jnp.concatenate([x[b * S:b * S + 1, :] for b in range(B)], axis=0)  # (B, H)
        pooled = jnp.tanh(_mm(cls, pw_ref[...]) + pb_ref[...])   # == output_1 of BertModel
        logits_ref[...] = _mm(pooled, cw_ref[...]) + cb_ref[...]


def bert_encode_classify(emb, bias, p, cfg=CFG):
    B, S = bias.shape
    H, NH, I, L = cfg["hidden"], cfg["heads"], cfg["intermediate"], cfg["layers"]
    HD = H // NH
    BS = B * S

    fixed = lambda *shape: pl.BlockSpec(shape, lambda l: (0,) * len(shape))
    perlayer = lambda *shape: pl.BlockSpec((None,) + shape,
                                           lambda l: (l,) + (0,) * len(shape))

    kernel = functools.partial(_bert_kernel, B=B, S=S, NH=NH, HD=HD)
    return pl.pallas_call(
        kernel,
        out_shape=jax.ShapeDtypeStruct((B, CLS_PAD), jnp.float32),
        grid=(L,),
        in_specs=[
            fixed(BS, H),                 # emb (pre-LN embedding sum), read at l==0 only
            fixed(B, S),                  # additive attention-mask bias (f32, precomputed)
            fixed(1, H), fixed(1, H),     # emb_ln gamma / beta
            perlayer(H, 3 * H),           # wqkv  (bf16, fused QKV)
            perlayer(1, 3 * H),           # bqkv
            perlayer(H, H),               # wo (bf16, full)
            perlayer(1, H),               # bo
            perlayer(1, H), perlayer(1, H),   # ln1 gamma / beta
            perlayer(H, I),               # w1 (bf16)
            perlayer(1, I),               # b1
            perlayer(I, H),               # w2 (bf16)
            perlayer(1, H),               # b2
            perlayer(1, H), perlayer(1, H),   # ln2 gamma / beta
            fixed(H, H), fixed(1, H),         # pooler weight (bf16) / bias
            fixed(H, CLS_PAD), fixed(1, CLS_PAD),  # classifier weight/bias, 128-lane padded
        ],
        out_specs=pl.BlockSpec((B, CLS_PAD), lambda l: (0, 0)),
        scratch_shapes=[pltpu.VMEM((BS, H), jnp.float32)],     # persistent residual stream
        compiler_params=pltpu.CompilerParams(dimension_semantics=("arbitrary",)),
    )(emb, bias,
      p["emb_ln_g"], p["emb_ln_b"],
      p["wqkv"], p["bqkv"], p["wo"], p["bo"], p["ln1_g"], p["ln1_b"],
      p["w1"], p["b1"], p["w2"], p["b2"], p["ln2_g"], p["ln2_b"],
      p["pool_w"], p["pool_b"], p["cls_w_pad"], p["cls_b_pad"])


# ----------------------------------------------------------------------------
# Parameters: deterministic init + host-side repack for the fused kernel
# ----------------------------------------------------------------------------
def init_params(key, cfg=CFG):
    H, I = cfg["hidden"], cfg["intermediate"]
    ks = iter(jax.random.split(key, 64))
    n = lambda shape: 0.02 * jax.random.normal(next(ks), shape, jnp.float32)
    z = lambda shape: jnp.zeros(shape, jnp.float32)
    o = lambda shape: jnp.ones(shape, jnp.float32)

    params = dict(
        word_emb=n((cfg["vocab"], H)),
        pos_emb=n((cfg["max_pos"], H)),
        type_emb=n((cfg["type_vocab"], H)),
        emb_ln_g=o((H,)), emb_ln_b=z((H,)),
        layers=[],
        pool_w=n((H, H)), pool_b=z((H,)),
        cls_w=n((H, cfg["classes"])), cls_b=z((cfg["classes"],)),
    )
    for _ in range(cfg["layers"]):
        params["layers"].append(dict(
            wq=n((H, H)), bq=z((H,)),
            wk=n((H, H)), bk=z((H,)),
            wv=n((H, H)), bv=z((H,)),
            wo=n((H, H)), bo=z((H,)),
            attn_ln_g=o((H,)), attn_ln_b=z((H,)),
            w1=n((H, I)), b1=z((I,)),
            w2=n((I, H)), b2=z((H,)),
            ffn_ln_g=o((H,)), ffn_ln_b=z((H,)),
        ))
    return params


def prep_params(params, cfg=CFG):
    """Host-side repack: fuse QKV weights, stack per-layer tensors along a leading L axis
    (layer-grid pipelining), cast matmul weights to bf16, pad classifier weights to a
    128-lane output."""
    H, I = cfg["hidden"], cfg["intermediate"]
    C = cfg["classes"]
    bf = lambda a: a.astype(jnp.bfloat16)
    st = lambda fn: jnp.stack([fn(l) for l in params["layers"]], axis=0)

    cls_w_pad = jnp.zeros((H, CLS_PAD), jnp.float32).at[:, :C].set(params["cls_w"])
    cls_b_pad = jnp.zeros((1, CLS_PAD), jnp.float32).at[:, :C].set(params["cls_b"].reshape(1, C))

    return dict(
        word_emb=params["word_emb"],
        pos_emb=params["pos_emb"],
        type_emb=params["type_emb"],
        emb_ln_g=params["emb_ln_g"].reshape(1, H),
        emb_ln_b=params["emb_ln_b"].reshape(1, H),
        wqkv=bf(st(lambda l: jnp.concatenate([l["wq"], l["wk"], l["wv"]], axis=1))),
        bqkv=st(lambda l: jnp.concatenate([l["bq"], l["bk"], l["bv"]]).reshape(1, 3 * H)),
        wo=bf(st(lambda l: l["wo"])),
        bo=st(lambda l: l["bo"].reshape(1, H)),
        ln1_g=st(lambda l: l["attn_ln_g"].reshape(1, H)),
        ln1_b=st(lambda l: l["attn_ln_b"].reshape(1, H)),
        w1=bf(st(lambda l: l["w1"])),
        b1=st(lambda l: l["b1"].reshape(1, I)),
        w2=bf(st(lambda l: l["w2"])),
        b2=st(lambda l: l["b2"].reshape(1, H)),
        ln2_g=st(lambda l: l["ffn_ln_g"].reshape(1, H)),
        ln2_b=st(lambda l: l["ffn_ln_b"].reshape(1, H)),
        pool_w=bf(params["pool_w"]),
        pool_b=params["pool_b"].reshape(1, H),
        cls_w_pad=bf(cls_w_pad),
        cls_b_pad=cls_b_pad,
    )


# ----------------------------------------------------------------------------
# BERTClass forward
# ----------------------------------------------------------------------------
def bert_class_forward(p, ids, mask, token_type_ids, cfg=CFG):
    B, S = ids.shape
    H = cfg["hidden"]

    # --- embeddings: gathers stay in plain JAX (glue) ---
    pos_ids = jnp.arange(S)
    emb = (p["word_emb"][ids]
           + p["pos_emb"][pos_ids][None, :, :]
           + p["type_emb"][token_type_ids]).reshape(B * S, H)
    # TODO(synk): embedding / attention / hidden dropouts omitted (eval mode == identity).

    # --- layer-invariant additive attention-mask bias, computed ONCE wrapper-side ---
    bias = (1.0 - mask.astype(jnp.float32)) * -10000.0           # (B, S) f32

    # --- one fused pallas_call: L encoder layers + pooler + classifier ---
    logits_pad = bert_encode_classify(emb, bias, p, cfg)         # (B, 128) lane-dense
    return logits_pad[:, :cfg["classes"]]                        # (B, 6)


# ----------------------------------------------------------------------------
if __name__ == "__main__":
    key = jax.random.PRNGKey(0)
    pkey, ikey, tkey = jax.random.split(key, 3)

    B, S = 2, 8
    params = prep_params(init_params(pkey))

    ids = jax.random.randint(ikey, (B, S), 0, CFG["vocab"], dtype=jnp.int32)
    mask = jnp.ones((B, S), dtype=jnp.int32)
    token_type_ids = jax.random.randint(tkey, (B, S), 0, CFG["type_vocab"], dtype=jnp.int32)

    fwd = jax.jit(functools.partial(bert_class_forward, params))
    logits = fwd(ids, mask, token_type_ids)
    jax.block_until_ready(logits)

    assert logits.shape == (B, CFG["classes"]), logits.shape
    assert bool(jnp.all(jnp.isfinite(logits)))
    print("KERNEL_OK")
</pallas_src>

<mosaic_0001>
module attributes {stable_mosaic.version = 11 : i64} {
  func.func @_bert_kernel(%arg0: i32, %arg1: memref<16x32xf32, #tpu.memory_space<vmem>>, %arg2: memref<2x8xf32, #tpu.memory_space<vmem>>, %arg3: memref<1x32xf32, #tpu.memory_space<vmem>>, %arg4: memref<1x32xf32, #tpu.memory_space<vmem>>, %arg5: memref<1x32x96xbf16, #tpu.memory_space<vmem>>, %arg6: memref<1x1x96xf32, #tpu.memory_space<vmem>>, %arg7: memref<1x32x32xbf16, #tpu.memory_space<vmem>>, %arg8: memref<1x1x32xf32, #tpu.memory_space<vmem>>, %arg9: memref<1x1x32xf32, #tpu.memory_space<vmem>>, %arg10: memref<1x1x32xf32, #tpu.memory_space<vmem>>, %arg11: memref<1x32x128xbf16, #tpu.memory_space<vmem>>, %arg12: memref<1x1x128xf32, #tpu.memory_space<vmem>>, %arg13: memref<1x128x32xbf16, #tpu.memory_space<vmem>>, %arg14: memref<1x1x32xf32, #tpu.memory_space<vmem>>, %arg15: memref<1x1x32xf32, #tpu.memory_space<vmem>>, %arg16: memref<1x1x32xf32, #tpu.memory_space<vmem>>, %arg17: memref<32x32xbf16, #tpu.memory_space<vmem>>, %arg18: memref<1x32xf32, #tpu.memory_space<vmem>>, %arg19: memref<32x128xbf16, #tpu.memory_space<vmem>>, %arg20: memref<1x128xf32, #tpu.memory_space<vmem>>, %arg21: memref<2x128xf32, #tpu.memory_space<vmem>>, %arg22: memref<16x32xf32, #tpu.memory_space<vmem>>) attributes {dimension_semantics = [#tpu.dimension_semantics<arbitrary>], iteration_bounds = array<i64: 2>, scalar_prefetch = 0 : i64, scratch_operands = 1 : i64, tpu.core_type = #tpu.core_type<tc>, window_params = [{pipeline_mode = #tpu.pipeline_mode<synchronous>, transform_indices = @transform_0, window_bounds = array<i64: 16, 32>}, {pipeline_mode = #tpu.pipeline_mode<synchronous>, transform_indices = @transform_1, window_bounds = array<i64: 2, 8>}, {pipeline_mode = #tpu.pipeline_mode<synchronous>, transform_indices = @transform_2, window_bounds = array<i64: 1, 32>}, {pipeline_mode = #tpu.pipeline_mode<synchronous>, transform_indices = @transform_3, window_bounds = array<i64: 1, 32>}, {transform_indices = @transform_4, window_bounds = array<i64: 1, 32, 96>}, {transform_indices = @transform_5, window_bounds = array<i64: 1, 1, 96>}, {transform_indices = @transform_6, window_bounds = array<i64: 1, 32, 32>}, {transform_indices = @transform_7, window_bounds = array<i64: 1, 1, 32>}, {transform_indices = @transform_8, window_bounds = array<i64: 1, 1, 32>}, {transform_indices = @transform_9, window_bounds = array<i64: 1, 1, 32>}, {transform_indices = @transform_10, window_bounds = array<i64: 1, 32, 128>}, {transform_indices = @transform_11, window_bounds = array<i64: 1, 1, 128>}, {transform_indices = @transform_12, window_bounds = array<i64: 1, 128, 32>}, {transform_indices = @transform_13, window_bounds = array<i64: 1, 1, 32>}, {transform_indices = @transform_14, window_bounds = array<i64: 1, 1, 32>}, {transform_indices = @transform_15, window_bounds = array<i64: 1, 1, 32>}, {pipeline_mode = #tpu.pipeline_mode<synchronous>, transform_indices = @transform_16, window_bounds = array<i64: 32, 32>}, {pipeline_mode = #tpu.pipeline_mode<synchronous>, transform_indices = @transform_17, window_bounds = array<i64: 1, 32>}, {pipeline_mode = #tpu.pipeline_mode<synchronous>, transform_indices = @transform_18, window_bounds = array<i64: 32, 128>}, {pipeline_mode = #tpu.pipeline_mode<synchronous>, transform_indices = @transform_19, window_bounds = array<i64: 1, 128>}, {pipeline_mode = #tpu.pipeline_mode<synchronous>, transform_indices = @transform_20, window_bounds = array<i64: 2, 128>}]} {
    %c0_i32 = arith.constant 0 : i32
    %0 = arith.cmpi eq, %arg0, %c0_i32 : i32
    %1 = arith.extui %0 : i1 to i32
    %c0_i32_0 = arith.constant 0 : i32
    %2 = arith.cmpi ne, %1, %c0_i32_0 : i32
    scf.if %2 {
      %c0_80 = arith.constant 0 : index
      %c0_81 = arith.constant 0 : index
      %218 = vector.load %arg1[%c0_80, %c0_81] : memref<16x32xf32, #tpu.memory_space<vmem>>, vector<16x32xf32>
      %c0_82 = arith.constant 0 : index
      %c0_83 = arith.constant 0 : index
      %219 = vector.load %arg3[%c0_82, %c0_83] : memref<1x32xf32, #tpu.memory_space<vmem>>, vector<1x32xf32>
      %c0_84 = arith.constant 0 : index
      %c0_85 = arith.constant 0 : index
      %220 = vector.load %arg4[%c0_84, %c0_85] : memref<1x32xf32, #tpu.memory_space<vmem>>, vector<1x32xf32>
      %cst_86 = arith.constant dense<0.000000e+00> : vector<16xf32>
      %221 = vector.multi_reduction <add>, %218, %cst_86 [1] : vector<16x32xf32> to vector<16xf32>
      %222 = vector.shape_cast %221 : vector<16xf32> to vector<16x1xf32>
      %cst_87 = arith.constant 3.200000e+01 : f32
      %223 = vector.broadcast %cst_87 : f32 to vector<16x1xf32>
      %224 = arith.divf %222, %223 : vector<16x1xf32>
      %225 = vector.broadcast %224 : vector<16x1xf32> to vector<16x32xf32>
      %226 = arith.subf %218, %225 : vector<16x32xf32>
      %227 = arith.mulf %226, %226 : vector<16x32xf32>
      %cst_88 = arith.constant dense<0.000000e+00> : vector<16xf32>
      %228 = vector.multi_reduction <add>, %227, %cst_88 [1] : vector<16x32xf32> to vector<16xf32>
      %229 = vector.shape_cast %228 : vector<16xf32> to vector<16x1xf32>
      %cst_89 = arith.constant 3.200000e+01 : f32
      %230 = vector.broadcast %cst_89 : f32 to vector<16x1xf32>
      %231 = arith.divf %229, %230 : vector<16x1xf32>
      %232 = vector.broadcast %224 : vector<16x1xf32> to vector<16x32xf32>
      %233 = arith.subf %218, %232 : vector<16x32xf32>
      %cst_90 = arith.constant 9.99999996E-13 : f32
      %234 = vector.broadcast %cst_90 : f32 to vector<16x1xf32>
      %235 = arith.addf %231, %234 : vector<16x1xf32>
      %236 = math.rsqrt %235 : vector<16x1xf32>
      %237 = vector.broadcast %236 : vector<16x1xf32> to vector<16x32xf32>
      %238 = arith.mulf %233, %237 : vector<16x32xf32>
      %239 = vector.broadcast %219 : vector<1x32xf32> to vector<16x32xf32>
      %240 = arith.mulf %238, %239 : vector<16x32xf32>
      %241 = vector.broadcast %220 : vector<1x32xf32> to vector<16x32xf32>
      %242 = arith.addf %240, %241 : vector<16x32xf32>
      %c0_91 = arith.constant 0 : index
      %c0_92 = arith.constant 0 : index
      %243 = vector.load %arg22[%c0_91, %c0_92] : memref<16x32xf32, #tpu.memory_space<vmem>>, vector<16x32xf32>
      tpu.vector_store %arg22[%c0_91, %c0_92], %242 {strides = array<i32>} : memref<16x32xf32, #tpu.memory_space<vmem>>, vector<16x32xf32>,
    } else {
    }
    %c0 = arith.constant 0 : index
    %c0_1 = arith.constant 0 : index
    %3 = vector.load %arg22[%c0, %c0_1] : memref<16x32xf32, #tpu.memory_space<vmem>>, vector<16x32xf32>
    %c0_2 = arith.constant 0 : index
    %c0_3 = arith.constant 0 : index
    %c0_4 = arith.constant 0 : index
    %4 = vector.load %arg5[%c0_2, %c0_3, %c0_4] : memref<1x32x96xbf16, #tpu.memory_space<vmem>>, vector<1x32x96xbf16>
    %5 = vector.shape_cast %4 : vector<1x32x96xbf16> to vector<32x96xbf16>
    %6 = arith.truncf %3 : vector<16x32xf32> to vector<16x32xbf16>
    %cst = arith.constant dense<0.000000e+00> : vector<16x96xf32>
    %7 = tpu.matmul %6, %5, %cst {dimension_numbers = #tpu.dot_dimension_numbers<[1], [0], [0], [1], [0, 0, 1, 1], [], []>} : vector<16x32xbf16>, vector<32x96xbf16>, vector<16x96xf32> -> vector<16x96xf32>
    %c0_5 = arith.constant 0 : index
    %c0_6 = arith.constant 0 : index
    %c0_7 = arith.constant 0 : index
    %8 = vector.load %arg6[%c0_5, %c0_6, %c0_7] : memref<1x1x96xf32, #tpu.memory_space<vmem>>, vector<1x1x96xf32>
    %9 = vector.shape_cast %8 : vector<1x1x96xf32> to vector<1x96xf32>
    %10 = vector.broadcast %9 : vector<1x96xf32> to vector<16x96xf32>
    %11 = arith.addf %7, %10 : vector<16x96xf32>
    %c0_8 = arith.constant 0 : index
    %c0_9 = arith.constant 0 : index
    %12 = vector.load %arg2[%c0_8, %c0_9] : memref<2x8xf32, #tpu.memory_space<vmem>>, vector<2x8xf32>
    %13 = vector.shape_cast %12 : vector<2x8xf32> to vector<2x1x8xf32>
    %14 = vector.extract_strided_slice %11 {offsets = [0, 0], sizes = [16, 8], strides = [1, 1]} : vector<16x96xf32> to vector<16x8xf32>
    %15 = vector.shape_cast %14 : vector<16x8xf32> to vector<2x8x8xf32>
    %16 = vector.extract_strided_slice %11 {offsets = [0, 32], sizes = [16, 8], strides = [1, 1]} : vector<16x96xf32> to vector<16x8xf32>
    %17 = vector.shape_cast %16 : vector<16x8xf32> to vector<2x8x8xf32>
    %18 = vector.extract_strided_slice %11 {offsets = [0, 64], sizes = [16, 8], strides = [1, 1]} : vector<16x96xf32> to vector<16x8xf32>
    %19 = vector.shape_cast %18 : vector<16x8xf32> to vector<2x8x8xf32>
    %20 = arith.truncf %15 : vector<2x8x8xf32> to vector<2x8x8xbf16>
    %21 = arith.truncf %17 : vector<2x8x8xf32> to vector<2x8x8xbf16>
    "tpu.trace_start"() <{level = 10 : i32, message = "bqd,bkd->bqk"}> : () -> ()
    %cst_10 = arith.constant dense<0.000000e+00> : vector<2x8x8xf32>
    %22 = tpu.matmul %20, %21, %cst_10 {dimension_numbers = #tpu.dot_dimension_numbers<[2], [2], [1], [1], [0, 0, 0, 1, 1, 1], [0], [0]>} : vector<2x8x8xbf16>, vector<2x8x8xbf16>, vector<2x8x8xf32> -> vector<2x8x8xf32>
    "tpu.trace_stop"() : () -> ()
    %cst_11 = arith.constant 0.353553385 : f32
    %23 = vector.broadcast %cst_11 : f32 to vector<2x8x8xf32>
    %24 = arith.mulf %22, %23 : vector<2x8x8xf32>
    %25 = vector.broadcast %13 : vector<2x1x8xf32> to vector<2x8x8xf32>
    %26 = arith.addf %24, %25 : vector<2x8x8xf32>
    %cst_12 = arith.constant dense<0xFF800000> : vector<2x8xf32>
    %27 = vector.multi_reduction <maximumf>, %26, %cst_12 [2] : vector<2x8x8xf32> to vector<2x8xf32>
    %28 = vector.shape_cast %27 : vector<2x8xf32> to vector<2x8x1xf32>
    %29 = vector.broadcast %28 : vector<2x8x1xf32> to vector<2x8x8xf32>
    %30 = arith.subf %26, %29 : vector<2x8x8xf32>
    %31 = math.exp %30 : vector<2x8x8xf32>
    %cst_13 = arith.constant dense<0.000000e+00> : vector<2x8xf32>
    %32 = vector.multi_reduction <add>, %31, %cst_13 [2] : vector<2x8x8xf32> to vector<2x8xf32>
    %33 = vector.shape_cast %32 : vector<2x8xf32> to vector<2x8x1xf32>
    %34 = tpu.reciprocal %33 {approx = true} : vector<2x8x1xf32> -> vector<2x8x1xf32>
    %35 = vector.broadcast %34 : vector<2x8x1xf32> to vector<2x8x8xf32>
    %36 = arith.mulf %31, %35 : vector<2x8x8xf32>
    %37 = arith.truncf %36 : vector<2x8x8xf32> to vector<2x8x8xbf16>
    %38 = arith.truncf %19 : vector<2x8x8xf32> to vector<2x8x8xbf16>
    "tpu.trace_start"() <{level = 10 : i32, message = "bqk,bkd->bqd"}> : () -> ()
    %cst_14 = arith.constant dense<0.000000e+00> : vector<2x8x8xf32>
    %39 = tpu.matmul %37, %38, %cst_14 {dimension_numbers = #tpu.dot_dimension_numbers<[2], [1], [1], [2], [0, 0, 0, 1, 1, 2], [0], [0]>} : vector<2x8x8xbf16>, vector<2x8x8xbf16>, vector<2x8x8xf32> -> vector<2x8x8xf32>
    "tpu.trace_stop"() : () -> ()
    %40 = vector.shape_cast %39 : vector<2x8x8xf32> to vector<16x8xf32>
    %41 = vector.extract_strided_slice %11 {offsets = [0, 8], sizes = [16, 8], strides = [1, 1]} : vector<16x96xf32> to vector<16x8xf32>
    %42 = vector.shape_cast %41 : vector<16x8xf32> to vector<2x8x8xf32>
    %43 = vector.extract_strided_slice %11 {offsets = [0, 40], sizes = [16, 8], strides = [1, 1]} : vector<16x96xf32> to vector<16x8xf32>
    %44 = vector.shape_cast %43 : vector<16x8xf32> to vector<2x8x8xf32>
    %45 = vector.extract_strided_slice %11 {offsets = [0, 72], sizes = [16, 8], strides = [1, 1]} : vector<16x96xf32> to vector<16x8xf32>
    %46 = vector.shape_cast %45 : vector<16x8xf32> to vector<2x8x8xf32>
    %47 = arith.truncf %42 : vector<2x8x8xf32> to vector<2x8x8xbf16>
    %48 = arith.truncf %44 : vector<2x8x8xf32> to vector<2x8x8xbf16>
    "tpu.trace_start"() <{level = 10 : i32, message = "bqd,bkd->bqk"}> : () -> ()
    %cst_15 = arith.constant dense<0.000000e+00> : vector<2x8x8xf32>
    %49 = tpu.matmul %47, %48, %cst_15 {dimension_numbers = #tpu.dot_dimension_numbers<[2], [2], [1], [1], [0, 0, 0, 1, 1, 1], [0], [0]>} : vector<2x8x8xbf16>, vector<2x8x8xbf16>, vector<2x8x8xf32> -> vector<2x8x8xf32>
    "tpu.trace_stop"() : () -> ()
    %cst_16 = arith.constant 0.353553385 : f32
    %50 = vector.broadcast %cst_16 : f32 to vector<2x8x8xf32>
    %51 = arith.mulf %49, %50 : vector<2x8x8xf32>
    %52 = vector.broadcast %13 : vector<2x1x8xf32> to vector<2x8x8xf32>
    %53 = arith.addf %51, %52 : vector<2x8x8xf32>
    %cst_17 = arith.constant dense<0xFF800000> : vector<2x8xf32>
    %54 = vector.multi_reduction <maximumf>, %53, %cst_17 [2] : vector<2x8x8xf32> to vector<2x8xf32>
    %55 = vector.shape_cast %54 : vector<2x8xf32> to vector<2x8x1xf32>
    %56 = vector.broadcast %55 : vector<2x8x1xf32> to vector<2x8x8xf32>
    %57 = arith.subf %53, %56 : vector<2x8x8xf32>
    %58 = math.exp %57 : vector<2x8x8xf32>
    %cst_18 = arith.constant dense<0.000000e+00> : vector<2x8xf32>
    %59 = vector.multi_reduction <add>, %58, %cst_18 [2] : vector<2x8x8xf32> to vector<2x8xf32>
    %60 = vector.shape_cast %59 : vector<2x8xf32> to vector<2x8x1xf32>
    %61 = tpu.reciprocal %60 {approx = true} : vector<2x8x1xf32> -> vector<2x8x1xf32>
    %62 = vector.broadcast %61 : vector<2x8x1xf32> to vector<2x8x8xf32>
    %63 = arith.mulf %58, %62 : vector<2x8x8xf32>
    %64 = arith.truncf %63 : vector<2x8x8xf32> to vector<2x8x8xbf16>
    %65 = arith.truncf %46 : vector<2x8x8xf32> to vector<2x8x8xbf16>
    "tpu.trace_start"() <{level = 10 : i32, message = "bqk,bkd->bqd"}> : () -> ()
    %cst_19 = arith.constant dense<0.000000e+00> : vector<2x8x8xf32>
    %66 = tpu.matmul %64, %65, %cst_19 {dimension_numbers = #tpu.dot_dimension_numbers<[2], [1], [1], [2], [0, 0, 0, 1, 1, 2], [0], [0]>} : vector<2x8x8xbf16>, vector<2x8x8xbf16>, vector<2x8x8xf32> -> vector<2x8x8xf32>
    "tpu.trace_stop"() : () -> ()
    %67 = vector.shape_cast %66 : vector<2x8x8xf32> to vector<16x8xf32>
    %68 = vector.extract_strided_slice %11 {offsets = [0, 16], sizes = [16, 8], strides = [1, 1]} : vector<16x96xf32> to vector<16x8xf32>
    %69 = vector.shape_cast %68 : vector<16x8xf32> to vector<2x8x8xf32>
    %70 = vector.extract_strided_slice %11 {offsets = [0, 48], sizes = [16, 8], strides = [1, 1]} : vector<16x96xf32> to vector<16x8xf32>
    %71 = vector.shape_cast %70 : vector<16x8xf32> to vector<2x8x8xf32>
    %72 = vector.extract_strided_slice %11 {offsets = [0, 80], sizes = [16, 8], strides = [1, 1]} : vector<16x96xf32> to vector<16x8xf32>
    %73 = vector.shape_cast %72 : vector<16x8xf32> to vector<2x8x8xf32>
    %74 = arith.truncf %69 : vector<2x8x8xf32> to vector<2x8x8xbf16>
    %75 = arith.truncf %71 : vector<2x8x8xf32> to vector<2x8x8xbf16>
    "tpu.trace_start"() <{level = 10 : i32, message = "bqd,bkd->bqk"}> : () -> ()
    %cst_20 = arith.constant dense<0.000000e+00> : vector<2x8x8xf32>
    %76 = tpu.matmul %74, %75, %cst_20 {dimension_numbers = #tpu.dot_dimension_numbers<[2], [2], [1], [1], [0, 0, 0, 1, 1, 1], [0], [0]>} : vector<2x8x8xbf16>, vector<2x8x8xbf16>, vector<2x8x8xf32> -> vector<2x8x8xf32>
    "tpu.trace_stop"() : () -> ()
    %cst_21 = arith.constant 0.353553385 : f32
    %77 = vector.broadcast %cst_21 : f32 to vector<2x8x8xf32>
    %78 = arith.mulf %76, %77 : vector<2x8x8xf32>
    %79 = vector.broadcast %13 : vector<2x1x8xf32> to vector<2x8x8xf32>
    %80 = arith.addf %78, %79 : vector<2x8x8xf32>
    %cst_22 = arith.constant dense<0xFF800000> : vector<2x8xf32>
    %81 = vector.multi_reduction <maximumf>, %80, %cst_22 [2] : vector<2x8x8xf32> to vector<2x8xf32>
    %82 = vector.shape_cast %81 : vector<2x8xf32> to vector<2x8x1xf32>
    %83 = vector.broadcast %82 : vector<2x8x1xf32> to vector<2x8x8xf32>
    %84 = arith.subf %80, %83 : vector<2x8x8xf32>
    %85 = math.exp %84 : vector<2x8x8xf32>
    %cst_23 = arith.constant dense<0.000000e+00> : vector<2x8xf32>
    %86 = vector.multi_reduction <add>, %85, %cst_23 [2] : vector<2x8x8xf32> to vector<2x8xf32>
    %87 = vector.shape_cast %86 : vector<2x8xf32> to vector<2x8x1xf32>
    %88 = tpu.reciprocal %87 {approx = true} : vector<2x8x1xf32> -> vector<2x8x1xf32>
    %89 = vector.broadcast %88 : vector<2x8x1xf32> to vector<2x8x8xf32>
    %90 = arith.mulf %85, %89 : vector<2x8x8xf32>
    %91 = arith.truncf %90 : vector<2x8x8xf32> to vector<2x8x8xbf16>
    %92 = arith.truncf %73 : vector<2x8x8xf32> to vector<2x8x8xbf16>
    "tpu.trace_start"() <{level = 10 : i32, message = "bqk,bkd->bqd"}> : () -> ()
    %cst_24 = arith.constant dense<0.000000e+00> : vector<2x8x8xf32>
    %93 = tpu.matmul %91, %92, %cst_24 {dimension_numbers = #tpu.dot_dimension_numbers<[2], [1], [1], [2], [0, 0, 0, 1, 1, 2], [0], [0]>} : vector<2x8x8xbf16>, vector<2x8x8xbf16>, vector<2x8x8xf32> -> vector<2x8x8xf32>
    "tpu.trace_stop"() : () -> ()
    %94 = vector.shape_cast %93 : vector<2x8x8xf32> to vector<16x8xf32>
    %95 = vector.extract_strided_slice %11 {offsets = [0, 24], sizes = [16, 8], strides = [1, 1]} : vector<16x96xf32> to vector<16x8xf32>
    %96 = vector.shape_cast %95 : vector<16x8xf32> to vector<2x8x8xf32>
    %97 = vector.extract_strided_slice %11 {offsets = [0, 56], sizes = [16, 8], strides = [1, 1]} : vector<16x96xf32> to vector<16x8xf32>
    %98 = vector.shape_cast %97 : vector<16x8xf32> to vector<2x8x8xf32>
    %99 = vector.extract_strided_slice %11 {offsets = [0, 88], sizes = [16, 8], strides = [1, 1]} : vector<16x96xf32> to vector<16x8xf32>
    %100 = vector.shape_cast %99 : vector<16x8xf32> to vector<2x8x8xf32>
    %101 = arith.truncf %96 : vector<2x8x8xf32> to vector<2x8x8xbf16>
    %102 = arith.truncf %98 : vector<2x8x8xf32> to vector<2x8x8xbf16>
    "tpu.trace_start"() <{level = 10 : i32, message = "bqd,bkd->bqk"}> : () -> ()
    %cst_25 = arith.constant dense<0.000000e+00> : vector<2x8x8xf32>
    %103 = tpu.matmul %101, %102, %cst_25 {dimension_numbers = #tpu.dot_dimension_numbers<[2], [2], [1], [1], [0, 0, 0, 1, 1, 1], [0], [0]>} : vector<2x8x8xbf16>, vector<2x8x8xbf16>, vector<2x8x8xf32> -> vector<2x8x8xf32>
    "tpu.trace_stop"() : () -> ()
    %cst_26 = arith.constant 0.353553385 : f32
    %104 = vector.broadcast %cst_26 : f32 to vector<2x8x8xf32>
    %105 = arith.mulf %103, %104 : vector<2x8x8xf32>
    %106 = vector.broadcast %13 : vector<2x1x8xf32> to vector<2x8x8xf32>
    %107 = arith.addf %105, %106 : vector<2x8x8xf32>
    %cst_27 = arith.constant dense<0xFF800000> : vector<2x8xf32>
    %108 = vector.multi_reduction <maximumf>, %107, %cst_27 [2] : vector<2x8x8xf32> to vector<2x8xf32>
    %109 = vector.shape_cast %108 : vector<2x8xf32> to vector<2x8x1xf32>
    %110 = vector.broadcast %109 : vector<2x8x1xf32> to vector<2x8x8xf32>
    %111 = arith.subf %107, %110 : vector<2x8x8xf32>
    %112 = math.exp %111 : vector<2x8x8xf32>
    %cst_28 = arith.constant dense<0.000000e+00> : vector<2x8xf32>
    %113 = vector.multi_reduction <add>, %112, %cst_28 [2] : vector<2x8x8xf32> to vector<2x8xf32>
    %114 = vector.shape_cast %113 : vector<2x8xf32> to vector<2x8x1xf32>
    %115 = tpu.reciprocal %114 {approx = true} : vector<2x8x1xf32> -> vector<2x8x1xf32>
    %116 = vector.broadcast %115 : vector<2x8x1xf32> to vector<2x8x8xf32>
    %117 = arith.mulf %112, %116 : vector<2x8x8xf32>
    %118 = arith.truncf %117 : vector<2x8x8xf32> to vector<2x8x8xbf16>
    %119 = arith.truncf %100 : vector<2x8x8xf32> to vector<2x8x8xbf16>
    "tpu.trace_start"() <{level = 10 : i32, message = "bqk,bkd->bqd"}> : () -> ()
    %cst_29 = arith.constant dense<0.000000e+00> : vector<2x8x8xf32>
    %120 = tpu.matmul %118, %119, %cst_29 {dimension_numbers = #tpu.dot_dimension_numbers<[2], [1], [1], [2], [0, 0, 0, 1, 1, 2], [0], [0]>} : vector<2x8x8xbf16>, vector<2x8x8xbf16>, vector<2x8x8xf32> -> vector<2x8x8xf32>
    "tpu.trace_stop"() : () -> ()
    %121 = vector.shape_cast %120 : vector<2x8x8xf32> to vector<16x8xf32>
    %122 = tpu.concatenate %40, %67, %94, %121 in 1 : vector<16x8xf32>, vector<16x8xf32>, vector<16x8xf32>, vector<16x8xf32> -> vector<16x32xf32>
    %c0_30 = arith.constant 0 : index
    %c0_31 = arith.constant 0 : index
    %c0_32 = arith.constant 0 : index
    %123 = vector.load %arg7[%c0_30, %c0_31, %c0_32] : memref<1x32x32xbf16, #tpu.memory_space<vmem>>, vector<1x32x32xbf16>
    %124 = vector.shape_cast %123 : vector<1x32x32xbf16> to vector<32x32xbf16>
    %125 = arith.truncf %122 : vector<16x32xf32> to vector<16x32xbf16>
    %cst_33 = arith.constant dense<0.000000e+00> : vector<16x32xf32>
    %126 = tpu.matmul %125, %124, %cst_33 {dimension_numbers = #tpu.dot_dimension_numbers<[1], [0], [0], [1], [0, 0, 1, 1], [], []>} : vector<16x32xbf16>, vector<32x32xbf16>, vector<16x32xf32> -> vector<16x32xf32>
    %c0_34 = arith.constant 0 : index
    %c0_35 = arith.constant 0 : index
    %c0_36 = arith.constant 0 : index
    %127 = vector.load %arg8[%c0_34, %c0_35, %c0_36] : memref<1x1x32xf32, #tpu.memory_space<vmem>>, vector<1x1x32xf32>
    %128 = vector.shape_cast %127 : vector<1x1x32xf32> to vector<1x32xf32>
    %129 = vector.broadcast %128 : vector<1x32xf32> to vector<16x32xf32>
    %130 = arith.addf %126, %129 : vector<16x32xf32>
    %131 = arith.addf %130, %3 : vector<16x32xf32>
    %c0_37 = arith.constant 0 : index
    %c0_38 = arith.constant 0 : index
    %c0_39 = arith.constant 0 : index
    %132 = vector.load %arg9[%c0_37, %c0_38, %c0_39] : memref<1x1x32xf32, #tpu.memory_space<vmem>>, vector<1x1x32xf32>
    %133 = vector.shape_cast %132 : vector<1x1x32xf32> to vector<1x32xf32>
    %c0_40 = arith.constant 0 : index
    %c0_41 = arith.constant 0 : index
    %c0_42 = arith.constant 0 : index
    %134 = vector.load %arg10[%c0_40, %c0_41, %c0_42] : memref<1x1x32xf32, #tpu.memory_space<vmem>>, vector<1x1x32xf32>
    %135 = vector.shape_cast %134 : vector<1x1x32xf32> to vector<1x32xf32>
    %cst_43 = arith.constant dense<0.000000e+00> : vector<16xf32>
    %136 = vector.multi_reduction <add>, %131, %cst_43 [1] : vector<16x32xf32> to vector<16xf32>
    %137 = vector.shape_cast %136 : vector<16xf32> to vector<16x1xf32>
    %cst_44 = arith.constant 3.200000e+01 : f32
    %138 = vector.broadcast %cst_44 : f32 to vector<16x1xf32>
    %139 = arith.divf %137, %138 : vector<16x1xf32>
    %140 = vector.broadcast %139 : vector<16x1xf32> to vector<16x32xf32>
    %141 = arith.subf %131, %140 : vector<16x32xf32>
    %142 = arith.mulf %141, %141 : vector<16x32xf32>
    %cst_45 = arith.constant dense<0.000000e+00> : vector<16xf32>
    %143 = vector.multi_reduction <add>, %142, %cst_45 [1] : vector<16x32xf32> to vector<16xf32>
    %144 = vector.shape_cast %143 : vector<16xf32> to vector<16x1xf32>
    %cst_46 = arith.constant 3.200000e+01 : f32
    %145 = vector.broadcast %cst_46 : f32 to vector<16x1xf32>
    %146 = arith.divf %144, %145 : vector<16x1xf32>
    %147 = vector.broadcast %139 : vector<16x1xf32> to vector<16x32xf32>
    %148 = arith.subf %131, %147 : vector<16x32xf32>
    %cst_47 = arith.constant 9.99999996E-13 : f32
    %149 = vector.broadcast %cst_47 : f32 to vector<16x1xf32>
    %150 = arith.addf %146, %149 : vector<16x1xf32>
    %151 = math.rsqrt %150 : vector<16x1xf32>
    %152 = vector.broadcast %151 : vector<16x1xf32> to vector<16x32xf32>
    %153 = arith.mulf %148, %152 : vector<16x32xf32>
    %154 = vector.broadcast %133 : vector<1x32xf32> to vector<16x32xf32>
    %155 = arith.mulf %153, %154 : vector<16x32xf32>
    %156 = vector.broadcast %135 : vector<1x32xf32> to vector<16x32xf32>
    %157 = arith.addf %155, %156 : vector<16x32xf32>
    %c0_48 = arith.constant 0 : index
    %c0_49 = arith.constant 0 : index
    %c0_50 = arith.constant 0 : index
    %158 = vector.load %arg11[%c0_48, %c0_49, %c0_50] : memref<1x32x128xbf16, #tpu.memory_space<vmem>>, vector<1x32x128xbf16>
    %159 = vector.shape_cast %158 : vector<1x32x128xbf16> to vector<32x128xbf16>
    %160 = arith.truncf %157 : vector<16x32xf32> to vector<16x32xbf16>
    %cst_51 = arith.constant dense<0.000000e+00> : vector<16x128xf32>
    %161 = tpu.matmul %160, %159, %cst_51 {dimension_numbers = #tpu.dot_dimension_numbers<[1], [0], [0], [1], [0, 0, 1, 1], [], []>} : vector<16x32xbf16>, vector<32x128xbf16>, vector<16x128xf32> -> vector<16x128xf32>
    %c0_52 = arith.constant 0 : index
    %c0_53 = arith.constant 0 : index
    %c0_54 = arith.constant 0 : index
    %162 = vector.load %arg12[%c0_52, %c0_53, %c0_54] : memref<1x1x128xf32, #tpu.memory_space<vmem>>, vector<1x1x128xf32>
    %163 = vector.shape_cast %162 : vector<1x1x128xf32> to vector<1x128xf32>
    %164 = vector.broadcast %163 : vector<1x128xf32> to vector<16x128xf32>
    %165 = arith.addf %161, %164 : vector<16x128xf32>
    %166 = arith.mulf %165, %165 : vector<16x128xf32>
    %167 = arith.mulf %165, %166 : vector<16x128xf32>
    %cst_55 = arith.constant 4.471500e-02 : f32
    %168 = vector.broadcast %cst_55 : f32 to vector<16x128xf32>
    %169 = arith.mulf %168, %167 : vector<16x128xf32>
    %170 = arith.addf %165, %169 : vector<16x128xf32>
    %cst_56 = arith.constant 0.797884583 : f32
    %171 = vector.broadcast %cst_56 : f32 to vector<16x128xf32>
    %172 = arith.mulf %171, %170 : vector<16x128xf32>
    %173 = math.tanh %172 : vector<16x128xf32>
    %cst_57 = arith.constant 1.000000e+00 : f32
    %174 = vector.broadcast %cst_57 : f32 to vector<16x128xf32>
    %175 = arith.addf %174, %173 : vector<16x128xf32>
    %cst_58 = arith.constant 5.000000e-01 : f32
    %176 = vector.broadcast %cst_58 : f32 to vector<16x128xf32>
    %177 = arith.mulf %176, %175 : vector<16x128xf32>
    %178 = arith.mulf %165, %177 : vector<16x128xf32>
    %c0_59 = arith.constant 0 : index
    %c0_60 = arith.constant 0 : index
    %c0_61 = arith.constant 0 : index
    %179 = vector.load %arg13[%c0_59, %c0_60, %c0_61] : memref<1x128x32xbf16, #tpu.memory_space<vmem>>, vector<1x128x32xbf16>
    %180 = vector.shape_cast %179 : vector<1x128x32xbf16> to vector<128x32xbf16>
    %181 = arith.truncf %178 : vector<16x128xf32> to vector<16x128xbf16>
    %cst_62 = arith.constant dense<0.000000e+00> : vector<16x32xf32>
    %182 = tpu.matmul %181, %180, %cst_62 {dimension_numbers = #tpu.dot_dimension_numbers<[1], [0], [0], [1], [0, 0, 1, 1], [], []>} : vector<16x128xbf16>, vector<128x32xbf16>, vector<16x32xf32> -> vector<16x32xf32>
    %c0_63 = arith.constant 0 : index
    %c0_64 = arith.constant 0 : index
    %c0_65 = arith.constant 0 : index
    %183 = vector.load %arg14[%c0_63, %c0_64, %c0_65] : memref<1x1x32xf32, #tpu.memory_space<vmem>>, vector<1x1x32xf32>
    %184 = vector.shape_cast %183 : vector<1x1x32xf32> to vector<1x32xf32>
    %185 = vector.broadcast %184 : vector<1x32xf32> to vector<16x32xf32>
    %186 = arith.addf %182, %185 : vector<16x32xf32>
    %187 = arith.addf %186, %157 : vector<16x32xf32>
    %c0_66 = arith.constant 0 : index
    %c0_67 = arith.constant 0 : index
    %c0_68 = arith.constant 0 : index
    %188 = vector.load %arg15[%c0_66, %c0_67, %c0_68] : memref<1x1x32xf32, #tpu.memory_space<vmem>>, vector<1x1x32xf32>
    %189 = vector.shape_cast %188 : vector<1x1x32xf32> to vector<1x32xf32>
    %c0_69 = arith.constant 0 : index
    %c0_70 = arith.constant 0 : index
    %c0_71 = arith.constant 0 : index
    %190 = vector.load %arg16[%c0_69, %c0_70, %c0_71] : memref<1x1x32xf32, #tpu.memory_space<vmem>>, vector<1x1x32xf32>
    %191 = vector.shape_cast %190 : vector<1x1x32xf32> to vector<1x32xf32>
    %cst_72 = arith.constant dense<0.000000e+00> : vector<16xf32>
    %192 = vector.multi_reduction <add>, %187, %cst_72 [1] : vector<16x32xf32> to vector<16xf32>
    %193 = vector.shape_cast %192 : vector<16xf32> to vector<16x1xf32>
    %cst_73 = arith.constant 3.200000e+01 : f32
    %194 = vector.broadcast %cst_73 : f32 to vector<16x1xf32>
    %195 = arith.divf %193, %194 : vector<16x1xf32>
    %196 = vector.broadcast %195 : vector<16x1xf32> to vector<16x32xf32>
    %197 = arith.subf %187, %196 : vector<16x32xf32>
    %198 = arith.mulf %197, %197 : vector<16x32xf32>
    %cst_74 = arith.constant dense<0.000000e+00> : vector<16xf32>
    %199 = vector.multi_reduction <add>, %198, %cst_74 [1] : vector<16x32xf32> to vector<16xf32>
    %200 = vector.shape_cast %199 : vector<16xf32> to vector<16x1xf32>
    %cst_75 = arith.constant 3.200000e+01 : f32
    %201 = vector.broadcast %cst_75 : f32 to vector<16x1xf32>
    %202 = arith.divf %200, %201 : vector<16x1xf32>
    %203 = vector.broadcast %195 : vector<16x1xf32> to vector<16x32xf32>
    %204 = arith.subf %187, %203 : vector<16x32xf32>
    %cst_76 = arith.constant 9.99999996E-13 : f32
    %205 = vector.broadcast %cst_76 : f32 to vector<16x1xf32>
    %206 = arith.addf %202, %205 : vector<16x1xf32>
    %207 = math.rsqrt %206 : vector<16x1xf32>
    %208 = vector.broadcast %207 : vector<16x1xf32> to vector<16x32xf32>
    %209 = arith.mulf %204, %208 : vector<16x32xf32>
    %210 = vector.broadcast %189 : vector<1x32xf32> to vector<16x32xf32>
    %211 = arith.mulf %209, %210 : vector<16x32xf32>
    %212 = vector.broadcast %191 : vector<1x32xf32> to vector<16x32xf32>
    %213 = arith.addf %211, %212 : vector<16x32xf32>
    %c0_77 = arith.constant 0 : index
    %c0_78 = arith.constant 0 : index
    %214 = vector.load %arg22[%c0_77, %c0_78] : memref<16x32xf32, #tpu.memory_space<vmem>>, vector<16x32xf32>
    tpu.vector_store %arg22[%c0_77, %c0_78], %213 {strides = array<i32>} : memref<16x32xf32, #tpu.memory_space<vmem>>, vector<16x32xf32>,
    %c1_i32 = arith.constant 1 : i32
    %215 = arith.cmpi eq, %arg0, %c1_i32 : i32
    %216 = arith.extui %215 : i1 to i32
    %c0_i32_79 = arith.constant 0 : i32
    %217 = arith.cmpi ne, %216, %c0_i32_79 : i32
    scf.if %217 {
      %218 = vector.extract_strided_slice %213 {offsets = [0, 0], sizes = [1, 32], strides = [1, 1]} : vector<16x32xf32> to vector<1x32xf32>
      %219 = vector.extract_strided_slice %213 {offsets = [8, 0], sizes = [1, 32], strides = [1, 1]} : vector<16x32xf32> to vector<1x32xf32>
      %220 = tpu.concatenate %218, %219 in 0 : vector<1x32xf32>, vector<1x32xf32> -> vector<2x32xf32>
      %c0_80 = arith.constant 0 : index
      %c0_81 = arith.constant 0 : index
      %221 = vector.load %arg17[%c0_80, %c0_81] : memref<32x32xbf16, #tpu.memory_space<vmem>>, vector<32x32xbf16>
      %222 = arith.truncf %220 : vector<2x32xf32> to vector<2x32xbf16>
      %cst_82 = arith.constant dense<0.000000e+00> : vector<2x32xf32>
      %223 = tpu.matmul %222, %221, %cst_82 {dimension_numbers = #tpu.dot_dimension_numbers<[1], [0], [0], [1], [0, 0, 1, 1], [], []>} : vector<2x32xbf16>, vector<32x32xbf16>, vector<2x32xf32> -> vector<2x32xf32>
      %c0_83 = arith.constant 0 : index
      %c0_84 = arith.constant 0 : index
      %224 = vector.load %arg18[%c0_83, %c0_84] : memref<1x32xf32, #tpu.memory_space<vmem>>, vector<1x32xf32>
      %225 = vector.broadcast %224 : vector<1x32xf32> to vector<2x32xf32>
      %226 = arith.addf %223, %225 : vector<2x32xf32>
      %227 = math.tanh %226 : vector<2x32xf32>
      %c0_85 = arith.constant 0 : index
      %c0_86 = arith.constant 0 : index
      %228 = vector.load %arg19[%c0_85, %c0_86] : memref<32x128xbf16, #tpu.memory_space<vmem>>, vector<32x128xbf16>
      %229 = arith.truncf %227 : vector<2x32xf32> to vector<2x32xbf16>
      %cst_87 = arith.constant dense<0.000000e+00> : vector<2x128xf32>
      %230 = tpu.matmul %229, %228, %cst_87 {dimension_numbers = #tpu.dot_dimension_numbers<[1], [0], [0], [1], [0, 0, 1, 1], [], []>} : vector<2x32xbf16>, vector<32x128xbf16>, vector<2x128xf32> -> vector<2x128xf32>
      %c0_88 = arith.constant 0 : index
      %c0_89 = arith.constant 0 : index
      %231 = vector.load %arg20[%c0_88, %c0_89] : memref<1x128xf32, #tpu.memory_space<vmem>>, vector<1x128xf32>
      %232 = vector.broadcast %231 : vector<1x128xf32> to vector<2x128xf32>
      %233 = arith.addf %230, %232 : vector<2x128xf32>
      %c0_90 = arith.constant 0 : index
      %c0_91 = arith.constant 0 : index
      %234 = vector.load %arg21[%c0_90, %c0_91] : memref<2x128xf32, #tpu.memory_space<vmem>>, vector<2x128xf32>
      tpu.vector_store %arg21[%c0_90, %c0_91], %233 {strides = array<i32>} : memref<2x128xf32, #tpu.memory_space<vmem>>, vector<2x128xf32>,
    } else {
    }
    return
  }
  func.func @transform_0(%arg0: i32) -> (i32, i32) {
    %c0_i32 = arith.constant 0 : i32
    %c0_i32_0 = arith.constant 0 : i32
    %c0_i32_1 = arith.constant 0 : i32
    return %c0_i32, %c0_i32_0 : i32, i32
  }
  func.func @transform_1(%arg0: i32) -> (i32, i32) {
    %c0_i32 = arith.constant 0 : i32
    %c0_i32_0 = arith.constant 0 : i32
    %c0_i32_1 = arith.constant 0 : i32
    return %c0_i32, %c0_i32_0 : i32, i32
  }
  func.func @transform_2(%arg0: i32) -> (i32, i32) {
    %c0_i32 = arith.constant 0 : i32
    %c0_i32_0 = arith.constant 0 : i32
    %c0_i32_1 = arith.constant 0 : i32
    return %c0_i32, %c0_i32_0 : i32, i32
  }
  func.func @transform_3(%arg0: i32) -> (i32, i32) {
    %c0_i32 = arith.constant 0 : i32
    %c0_i32_0 = arith.constant 0 : i32
    %c0_i32_1 = arith.constant 0 : i32
    return %c0_i32, %c0_i32_0 : i32, i32
  }
  func.func @transform_4(%arg0: i32) -> (i32, i32, i32) {
    %c0_i32 = arith.constant 0 : i32
    %c0_i32_0 = arith.constant 0 : i32
    %c0_i32_1 = arith.constant 0 : i32
    return %arg0, %c0_i32, %c0_i32_0 : i32, i32, i32
  }
  func.func @transform_5(%arg0: i32) -> (i32, i32, i32) {
    %c0_i32 = arith.constant 0 : i32
    %c0_i32_0 = arith.constant 0 : i32
    %c0_i32_1 = arith.constant 0 : i32
    return %arg0, %c0_i32, %c0_i32_0 : i32, i32, i32
  }
  func.func @transform_6(%arg0: i32) -> (i32, i32, i32) {
    %c0_i32 = arith.constant 0 : i32
    %c0_i32_0 = arith.constant 0 : i32
    %c0_i32_1 = arith.constant 0 : i32
    return %arg0, %c0_i32, %c0_i32_0 : i32, i32, i32
  }
  func.func @transform_7(%arg0: i32) -> (i32, i32, i32) {
    %c0_i32 = arith.constant 0 : i32
    %c0_i32_0 = arith.constant 0 : i32
    %c0_i32_1 = arith.constant 0 : i32
    return %arg0, %c0_i32, %c0_i32_0 : i32, i32, i32
  }
  func.func @transform_8(%arg0: i32) -> (i32, i32, i32) {
    %c0_i32 = arith.constant 0 : i32
    %c0_i32_0 = arith.constant 0 : i32
    %c0_i32_1 = arith.constant 0 : i32
    return %arg0, %c0_i32, %c0_i32_0 : i32, i32, i32
  }
  func.func @transform_9(%arg0: i32) -> (i32, i32, i32) {
    %c0_i32 = arith.constant 0 : i32
    %c0_i32_0 = arith.constant 0 : i32
    %c0_i32_1 = arith.constant 0 : i32
    return %arg0, %c0_i32, %c0_i32_0 : i32, i32, i32
  }
  func.func @transform_10(%arg0: i32) -> (i32, i32, i32) {
    %c0_i32 = arith.constant 0 : i32
    %c0_i32_0 = arith.constant 0 : i32
    %c0_i32_1 = arith.constant 0 : i32
    return %arg0, %c0_i32, %c0_i32_0 : i32, i32, i32
  }
  func.func @transform_11(%arg0: i32) -> (i32, i32, i32) {
    %c0_i32 = arith.constant 0 : i32
    %c0_i32_0 = arith.constant 0 : i32
    %c0_i32_1 = arith.constant 0 : i32
    return %arg0, %c0_i32, %c0_i32_0 : i32, i32, i32
  }
  func.func @transform_12(%arg0: i32) -> (i32, i32, i32) {
    %c0_i32 = arith.constant 0 : i32
    %c0_i32_0 = arith.constant 0 : i32
    %c0_i32_1 = arith.constant 0 : i32
    return %arg0, %c0_i32, %c0_i32_0 : i32, i32, i32
  }
  func.func @transform_13(%arg0: i32) -> (i32, i32, i32) {
    %c0_i32 = arith.constant 0 : i32
    %c0_i32_0 = arith.constant 0 : i32
    %c0_i32_1 = arith.constant 0 : i32
    return %arg0, %c0_i32, %c0_i32_0 : i32, i32, i32
  }
  func.func @transform_14(%arg0: i32) -> (i32, i32, i32) {
    %c0_i32 = arith.constant 0 : i32
    %c0_i32_0 = arith.constant 0 : i32
    %c0_i32_1 = arith.constant 0 : i32
    return %arg0, %c0_i32, %c0_i32_0 : i32, i32, i32
  }
  func.func @transform_15(%arg0: i32) -> (i32, i32, i32) {
    %c0_i32 = arith.constant 0 : i32
    %c0_i32_0 = arith.constant 0 : i32
    %c0_i32_1 = arith.constant 0 : i32
    return %arg0, %c0_i32, %c0_i32_0 : i32, i32, i32
  }
  func.func @transform_16(%arg0: i32) -> (i32, i32) {
    %c0_i32 = arith.constant 0 : i32
    %c0_i32_0 = arith.constant 0 : i32
    %c0_i32_1 = arith.constant 0 : i32
    return %c0_i32, %c0_i32_0 : i32, i32
  }
  func.func @transform_17(%arg0: i32) -> (i32, i32) {
    %c0_i32 = arith.constant 0 : i32
    %c0_i32_0 = arith.constant 0 : i32
    %c0_i32_1 = arith.constant 0 : i32
    return %c0_i32, %c0_i32_0 : i32, i32
  }
  func.func @transform_18(%arg0: i32) -> (i32, i32) {
    %c0_i32 = arith.constant 0 : i32
    %c0_i32_0 = arith.constant 0 : i32
    %c0_i32_1 = arith.constant 0 : i32
    return %c0_i32, %c0_i32_0 : i32, i32
  }
  func.func @transform_19(%arg0: i32) -> (i32, i32) {
    %c0_i32 = arith.constant 0 : i32
    %c0_i32_0 = arith.constant 0 : i32
    %c0_i32_1 = arith.constant 0 : i32
    return %c0_i32, %c0_i32_0 : i32, i32
  }
  func.func @transform_20(%arg0: i32) -> (i32, i32) {
    %c0_i32 = arith.constant 0 : i32
    %c0_i32_0 = arith.constant 0 : i32
    %c0_i32_1 = arith.constant 0 : i32
    return %c0_i32, %c0_i32_0 : i32, i32
  }
}

</mosaic_0001>

<llo_original>
// kernel: bert_class_forward.1
$region0: #{bert_class_forward.1}
  #allocation0 [shape = 'u32[]', space=smem, size = 0x4, offset = 0x4, fixed_abs, tag = 'smem constant byte address 0x4 - core index']
  #allocation1 [shape = 'u32[144,128]{1,0:T(1,128)}', space=vmem, size = 0x12000, scoped, tag = 'internal scratch']
  #allocation2 [shape = 'f32[16,32]{1,0:T(8,128)}', space=vmem, size = 0x2000, scoped, tag = 'scratch operand']
  %s0 = inlined_call_operand.vmem [shape: f32[16,32], index: 0, kind: input, shape index: {}]
  %s1 = inlined_call_operand.vmem [shape: f32[2,8], index: 1, kind: input, shape index: {}]
  %s2 = inlined_call_operand.vmem [shape: f32[1,32], index: 2, kind: input, shape index: {}]
  %s3 = inlined_call_operand.vmem [shape: f32[1,32], index: 3, kind: input, shape index: {}, may-alias: {3,17}]
  %s4 = inlined_call_operand.vmem [shape: bf16[2,32,96], index: 4, kind: input, shape index: {}]
  %s5 = inlined_call_operand.vmem [shape: f32[2,1,96], index: 5, kind: input, shape index: {}]
  %s6 = inlined_call_operand.vmem [shape: bf16[2,32,32], index: 6, kind: input, shape index: {}]
  %s7 = inlined_call_operand.vmem [shape: f32[2,1,32], index: 7, kind: input, shape index: {}, may-alias: {7,9,13,15}]
  %s8 = inlined_call_operand.vmem [shape: f32[2,1,32], index: 8, kind: input, shape index: {}, may-alias: {8,14}]
  %s9 = inlined_call_operand.vmem [shape: f32[2,1,32], index: 9, kind: input, shape index: {}, may-alias: {7,9,13,15}]
  %s10 = inlined_call_operand.vmem [shape: bf16[2,32,128], index: 10, kind: input, shape index: {}]
  %s11 = inlined_call_operand.vmem [shape: f32[2,1,128], index: 11, kind: input, shape index: {}]
  %s12 = inlined_call_operand.vmem [shape: bf16[2,128,32], index: 12, kind: input, shape index: {}]
  %s13 = inlined_call_operand.vmem [shape: f32[2,1,32], index: 13, kind: input, shape index: {}, may-alias: {7,9,13,15}]
  %s14 = inlined_call_operand.vmem [shape: f32[2,1,32], index: 14, kind: input, shape index: {}, may-alias: {8,14}]
  %s15 = inlined_call_operand.vmem [shape: f32[2,1,32], index: 15, kind: input, shape index: {}, may-alias: {7,9,13,15}]
  %s16 = inlined_call_operand.vmem [shape: bf16[32,32], index: 16, kind: input, shape index: {}]
  %s17 = inlined_call_operand.vmem [shape: f32[1,32], index: 17, kind: input, shape index: {}, may-alias: {3,17}]
  %s18 = inlined_call_operand.vmem [shape: bf16[32,128], index: 18, kind: input, shape index: {}]
  %s19 = inlined_call_operand.vmem [shape: f32[1,128], index: 19, kind: input, shape index: {}]
  %s20 = inlined_call_operand.hbm [shape: f32[2,128], index: 20, kind: output, shape index: {}]
  %s21 = sld [smem:[#allocation0]]
  $region121: #{bert_class_forward.1} parent=0
    _
  %s23 = ssub.s32 1, %s21
  %s24 = scalar_select 0, %s23, %s21
  $region1: #{bert_class_forward.1} parent=0
    #allocation3 [shape = 'u8[1024]{0}', space=vmem, size = 0x400, scoped, tag = 'output window, operand 0, single buffered']
    #allocation4 [shape = 's32[2]{0}', space=sflag, size = 0x8, scoped, tag = 'scoped memory for bert_class_forward.1']
    %25 = vsyncpa [#allocation4], 0
    loop: start=0, step=1, limit=4
    $region2: #{bert_class_forward.1} parent=1 // loop_pre_header
      _
    $region3: #{bert_class_forward.1} parent=1 // loop_header
      %s27 = sphi 0, %s31
      %p28 = scmp.ge.s32.totalorder %s27, 4
      %s35 = sphi 0, %s35
      %s37 = sphi 0, %s35
      %s38 = sphi 0, %s37
      %s52 = sphi 0, %s38
      %s56 = sphi 0, %s56
      %s58 = sphi 0, %s56
      %s59 = sphi 0, %s58
      %s73 = sphi 0, %s59
      %s77 = sphi 0, %s77
      %s79 = sphi 0, %s77
      %s80 = sphi 0, %s79
      %s94 = sphi 0, %s80
      %s98 = sphi 0, %s98
      %s100 = sphi 0, %s98
      %s101 = sphi 0, %s100
      %s115 = sphi 0, %s101
      %s121 = sphi 0, %s123
      %s124 = sphi 0, %s121
      %s125 = sphi 0, %s124
      %s141 = sphi 0, %s125
      %s147 = sphi 0, %s149
      %s150 = sphi 0, %s147
      %s151 = sphi 0, %s150
      %s167 = sphi 0, %s151
      %s173 = sphi 0, %s175
      %s176 = sphi 0, %s173
      %s177 = sphi 0, %s176
      %s193 = sphi 0, %s177
      %s199 = sphi 0, %s201
      %s202 = sphi 0, %s199
      %s203 = sphi 0, %s202
      %s219 = sphi 0, %s203
      %s225 = sphi 0, %s227
      %s228 = sphi 0, %s225
      %s229 = sphi 0, %s228
      %s245 = sphi 0, %s229
      %s251 = sphi 0, %s253
      %s254 = sphi 0, %s251
      %s255 = sphi 0, %s254
      %s271 = sphi 0, %s255
      %s277 = sphi 0, %s279
      %s280 = sphi 0, %s277
      %s281 = sphi 0, %s280
      %s297 = sphi 0, %s281
      %s303 = sphi 0, %s305
      %s306 = sphi 0, %s303
      %s307 = sphi 0, %s306
      %s323 = sphi 0, %s307
      %s329 = sphi 0, %s331
      %s332 = sphi 0, %s329
      %s333 = sphi 0, %s332
      %s349 = sphi 0, %s333
      %s355 = sphi 0, %s357
      %s358 = sphi 0, %s355
      %s359 = sphi 0, %s358
      %s375 = sphi 0, %s359
      %s381 = sphi 0, %s383
      %s384 = sphi 0, %s381
      %s385 = sphi 0, %s384
      %s401 = sphi 0, %s385
      %s407 = sphi 0, %s409
      %s410 = sphi 0, %s407
      %s411 = sphi 0, %s410
      %s427 = sphi 0, %s411
      %s431 = sphi 0, %s431
      %s433 = sphi 0, %s431
      %s434 = sphi 0, %s433
      %s448 = sphi 0, %s434
      %s452 = sphi 0, %s452
      %s454 = sphi 0, %s452
      %s455 = sphi 0, %s454
      %s469 = sphi 0, %s455
      %s473 = sphi 0, %s473
      %s475 = sphi 0, %s473
      %s476 = sphi 0, %s475
      %s490 = sphi 0, %s476
      %s494 = sphi 0, %s494
      %s496 = sphi 0, %s494
      %s497 = sphi 0, %s496
      %s511 = sphi 0, %s497
      %s515 = sphi 0, %s515
      %s517 = sphi 0, %s515
      %s518 = sphi 0, %s517
      %s532 = sphi 0, %s518
    $region4: #{bert_class_forward.1} parent=1 // loop_header_branch
      %30 = sbr.rel (%p28) target = $region8
    $region5: #{bert_class_forward.1} parent=1 // loop_body
      %s32 = ssub.s32 %s27, 1
      %s33 = ssub.s32 %s27, 2
      %s34 = sadd.s32 %s27, 1
      %s36 = sadd.s32 %s35, 1
      %p39 = scmp.eq.s32.totalorder %s27, 1
      %p40 = scmp.ne.s32.totalorder %s35, %s37
      %p41 = scmp.eq.s32.totalorder %s27, 0
      %p42 = por %p40, %p41
      %p43 = scmp.ne.s32.totalorder %s35, %s37
      %p44 = scmp.eq.s32.totalorder %s32, 1
      %p45 = por %p43, %p44
      %p46 = scmp.ne.s32.totalorder %s37, %s38
      %p47 = scmp.eq.s32.totalorder %s32, 0
      %p48 = por %p46, %p47
      %p49 = scmp.ne.s32.totalorder %s37, %s38
      %p50 = scmp.eq.s32.totalorder %s33, 1
      %p51 = por %p49, %p50
      %p53 = scmp.ne.s32.totalorder %s38, %s52
      %p54 = scmp.eq.s32.totalorder %s33, 0
      %p55 = por %p53, %p54
      %s57 = sadd.s32 %s56, 1
      %p60 = scmp.eq.s32.totalorder %s27, 1
      %p61 = scmp.ne.s32.totalorder %s56, %s58
      %p62 = scmp.eq.s32.totalorder %s27, 0
      %p63 = por %p61, %p62
      %p64 = scmp.ne.s32.totalorder %s56, %s58
      %p65 = scmp.eq.s32.totalorder %s32, 1
      %p66 = por %p64, %p65
      %p67 = scmp.ne.s32.totalorder %s58, %s59
      %p68 = scmp.eq.s32.totalorder %s32, 0
      %p69 = por %p67, %p68
      %p70 = scmp.ne.s32.totalorder %s58, %s59
      %p71 = scmp.eq.s32.totalorder %s33, 1
      %p72 = por %p70, %p71
      %p74 = scmp.ne.s32.totalorder %s59, %s73
      %p75 = scmp.eq.s32.totalorder %s33, 0
      %p76 = por %p74, %p75
      %s78 = sadd.s32 %s77, 1
      %p81 = scmp.eq.s32.totalorder %s27, 1
      %p82 = scmp.ne.s32.totalorder %s77, %s79
      %p83 = scmp.eq.s32.totalorder %s27, 0
      %p84 = por %p82, %p83
      %p85 = scmp.ne.s32.totalorder %s77, %s79
      %p86 = scmp.eq.s32.totalorder %s32, 1
      %p87 = por %p85, %p86
      %p88 = scmp.ne.s32.totalorder %s79, %s80
      %p89 = scmp.eq.s32.totalorder %s32, 0
      %p90 = por %p88, %p89
      %p91 = scmp.ne.s32.totalorder %s79, %s80
      %p92 = scmp.eq.s32.totalorder %s33, 1
      %p93 = por %p91, %p92
      %p95 = scmp.ne.s32.totalorder %s80, %s94
      %p96 = scmp.eq.s32.totalorder %s33, 0
      %p97 = por %p95, %p96
      %s99 = sadd.s32 %s98, 1
      %p102 = scmp.eq.s32.totalorder %s27, 1
      %p103 = scmp.ne.s32.totalorder %s98, %s100
      %p104 = scmp.eq.s32.totalorder %s27, 0
      %p105 = por %p103, %p104
      %p106 = scmp.ne.s32.totalorder %s98, %s100
      %p107 = scmp.eq.s32.totalorder %s32, 1
      %p108 = por %p106, %p107
      %p109 = scmp.ne.s32.totalorder %s100, %s101
      %p110 = scmp.eq.s32.totalorder %s32, 0
      %p111 = por %p109, %p110
      %p112 = scmp.ne.s32.totalorder %s100, %s101
      %p113 = scmp.eq.s32.totalorder %s33, 1
      %p114 = por %p112, %p113
      %p116 = scmp.ne.s32.totalorder %s101, %s115
      %p117 = scmp.eq.s32.totalorder %s33, 0
      %p118 = por %p116, %p117
      %s119 = ssub.s32 %s27, %s34
      %p120 = scmp.eq.s32.totalorder %s119, 0
      %s122 = sadd.s32 %s121, 1
      %s123 = scalar_select %p120, %s121, %s122
      %p126 = pneg %p120
      %p127 = scmp.eq.s32.totalorder %s27, 1
      %p128 = por %p126, %p127
      %p129 = scmp.ne.s32.totalorder %s121, %s124
      %p130 = scmp.eq.s32.totalorder %s27, 0
      %p131 = por %p129, %p130
      %p132 = scmp.ne.s32.totalorder %s121, %s124
      %p133 = scmp.eq.s32.totalorder %s32, 1
      %p134 = por %p132, %p133
      %p135 = scmp.ne.s32.totalorder %s124, %s125
      %p136 = scmp.eq.s32.totalorder %s32, 0
      %p137 = por %p135, %p136
      %p138 = scmp.ne.s32.totalorder %s124, %s125
      %p139 = scmp.eq.s32.totalorder %s33, 1
      %p140 = por %p138, %p139
      %p142 = scmp.ne.s32.totalorder %s125, %s141
      %p143 = scmp.eq.s32.totalorder %s33, 0
      %p144 = por %p142, %p143
      %s145 = ssub.s32 %s27, %s34
      %p146 = scmp.eq.s32.totalorder %s145, 0
      %s148 = sadd.s32 %s147, 1
      %s149 = scalar_select %p146, %s147, %s148
      %p152 = pneg %p146
      %p153 = scmp.eq.s32.totalorder %s27, 1
      %p154 = por %p152, %p153
      %p155 = scmp.ne.s32.totalorder %s147, %s150
      %p156 = scmp.eq.s32.totalorder %s27, 0
      %p157 = por %p155, %p156
      %p158 = scmp.ne.s32.totalorder %s147, %s150
      %p159 = scmp.eq.s32.totalorder %s32, 1
      %p160 = por %p158, %p159
      %p161 = scmp.ne.s32.totalorder %s150, %s151
      %p162 = scmp.eq.s32.totalorder %s32, 0
      %p163 = por %p161, %p162
      %p164 = scmp.ne.s32.totalorder %s150, %s151
      %p165 = scmp.eq.s32.totalorder %s33, 1
      %p166 = por %p164, %p165
      %p168 = scmp.ne.s32.totalorder %s151, %s167
      %p169 = scmp.eq.s32.totalorder %s33, 0
      %p170 = por %p168, %p169
      %s171 = ssub.s32 %s27, %s34
      %p172 = scmp.eq.s32.totalorder %s171, 0
      %s174 = sadd.s32 %s173, 1
      %s175 = scalar_select %p172, %s173, %s174
      %p178 = pneg %p172
      %p179 = scmp.eq.s32.totalorder %s27, 1
      %p180 = por %p178, %p179
      %p181 = scmp.ne.s32.totalorder %s173, %s176
      %p182 = scmp.eq.s32.totalorder %s27, 0
      %p183 = por %p181, %p182
      %p184 = scmp.ne.s32.totalorder %s173, %s176
      %p185 = scmp.eq.s32.totalorder %s32, 1
      %p186 = por %p184, %p185
      %p187 = scmp.ne.s32.totalorder %s176, %s177
      %p188 = scmp.eq.s32.totalorder %s32, 0
      %p189 = por %p187, %p188
      %p190 = scmp.ne.s32.totalorder %s176, %s177
      %p191 = scmp.eq.s32.totalorder %s33, 1
      %p192 = por %p190, %p191
      %p194 = scmp.ne.s32.totalorder %s177, %s193
      %p195 = scmp.eq.s32.totalorder %s33, 0
      %p196 = por %p194, %p195
      %s197 = ssub.s32 %s27, %s34
      %p198 = scmp.eq.s32.totalorder %s197, 0
      %s200 = sadd.s32 %s199, 1
      %s201 = scalar_select %p198, %s199, %s200
      %p204 = pneg %p198
      %p205 = scmp.eq.s32.totalorder %s27, 1
      %p206 = por %p204, %p205
      %p207 = scmp.ne.s32.totalorder %s199, %s202
      %p208 = scmp.eq.s32.totalorder %s27, 0
      %p209 = por %p207, %p208
      %p210 = scmp.ne.s32.totalorder %s199, %s202
      %p211 = scmp.eq.s32.totalorder %s32, 1
      %p212 = por %p210, %p211
      %p213 = scmp.ne.s32.totalorder %s202, %s203
      %p214 = scmp.eq.s32.totalorder %s32, 0
      %p215 = por %p213, %p214
      %p216 = scmp.ne.s32.totalorder %s202, %s203
      %p217 = scmp.eq.s32.totalorder %s33, 1
      %p218 = por %p216, %p217
      %p220 = scmp.ne.s32.totalorder %s203, %s219
      %p221 = scmp.eq.s32.totalorder %s33, 0
      %p222 = por %p220, %p221
      %s223 = ssub.s32 %s27, %s34
      %p224 = scmp.eq.s32.totalorder %s223, 0
      %s226 = sadd.s32 %s225, 1
      %s227 = scalar_select %p224, %s225, %s226
      %p230 = pneg %p224
      %p231 = scmp.eq.s32.totalorder %s27, 1
      %p232 = por %p230, %p231
      %p233 = scmp.ne.s32.totalorder %s225, %s228
      %p234 = scmp.eq.s32.totalorder %s27, 0
      %p235 = por %p233, %p234
      %p236 = scmp.ne.s32.totalorder %s225, %s228
      %p237 = scmp.eq.s32.totalorder %s32, 1
      %p238 = por %p236, %p237
      %p239 = scmp.ne.s32.totalorder %s228, %s229
      %p240 = scmp.eq.s32.totalorder %s32, 0
      %p241 = por %p239, %p240
      %p242 = scmp.ne.s32.totalorder %s228, %s229
      %p243 = scmp.eq.s32.totalorder %s33, 1
      %p244 = por %p242, %p243
      %p246 = scmp.ne.s32.totalorder %s229, %s245
      %p247 = scmp.eq.s32.totalorder %s33, 0
      %p248 = por %p246, %p247
      %s249 = ssub.s32 %s27, %s34
      %p250 = scmp.eq.s32.totalorder %s249, 0
      %s252 = sadd.s32 %s251, 1
      %s253 = scalar_select %p250, %s251, %s252
      %p256 = pneg %p250
      %p257 = scmp.eq.s32.totalorder %s27, 1
      %p258 = por %p256, %p257
      %p259 = scmp.ne.s32.totalorder %s251, %s254
      %p260 = scmp.eq.s32.totalorder %s27, 0
      %p261 = por %p259, %p260
      %p262 = scmp.ne.s32.totalorder %s251, %s254
      %p263 = scmp.eq.s32.totalorder %s32, 1
      %p264 = por %p262, %p263
      %p265 = scmp.ne.s32.totalorder %s254, %s255
      %p266 = scmp.eq.s32.totalorder %s32, 0
      %p267 = por %p265, %p266
      %p268 = scmp.ne.s32.totalorder %s254, %s255
      %p269 = scmp.eq.s32.totalorder %s33, 1
      %p270 = por %p268, %p269
      %p272 = scmp.ne.s32.totalorder %s255, %s271
      %p273 = scmp.eq.s32.totalorder %s33, 0
      %p274 = por %p272, %p273
      %s275 = ssub.s32 %s27, %s34
      %p276 = scmp.eq.s32.totalorder %s275, 0
      %s278 = sadd.s32 %s277, 1
      %s279 = scalar_select %p276, %s277, %s278
      %p282 = pneg %p276
      %p283 = scmp.eq.s32.totalorder %s27, 1
      %p284 = por %p282, %p283
      %p285 = scmp.ne.s32.totalorder %s277, %s280
      %p286 = scmp.eq.s32.totalorder %s27, 0
      %p287 = por %p285, %p286
      %p288 = scmp.ne.s32.totalorder %s277, %s280
      %p289 = scmp.eq.s32.totalorder %s32, 1
      %p290 = por %p288, %p289
      %p291 = scmp.ne.s32.totalorder %s280, %s281
      %p292 = scmp.eq.s32.totalorder %s32, 0
      %p293 = por %p291, %p292
      %p294 = scmp.ne.s32.totalorder %s280, %s281
      %p295 = scmp.eq.s32.totalorder %s33, 1
      %p296 = por %p294, %p295
      %p298 = scmp.ne.s32.totalorder %s281, %s297
      %p299 = scmp.eq.s32.totalorder %s33, 0
      %p300 = por %p298, %p299
      %s301 = ssub.s32 %s27, %s34
      %p302 = scmp.eq.s32.totalorder %s301, 0
      %s304 = sadd.s32 %s303, 1
      %s305 = scalar_select %p302, %s303, %s304
      %p308 = pneg %p302
      %p309 = scmp.eq.s32.totalorder %s27, 1
      %p310 = por %p308, %p309
      %p311 = scmp.ne.s32.totalorder %s303, %s306
      %p312 = scmp.eq.s32.totalorder %s27, 0
      %p313 = por %p311, %p312
      %p314 = scmp.ne.s32.totalorder %s303, %s306
      %p315 = scmp.eq.s32.totalorder %s32, 1
      %p316 = por %p314, %p315
      %p317 = scmp.ne.s32.totalorder %s306, %s307
      %p318 = scmp.eq.s32.totalorder %s32, 0
      %p319 = por %p317, %p318
      %p320 = scmp.ne.s32.totalorder %s306, %s307
      %p321 = scmp.eq.s32.totalorder %s33, 1
      %p322 = por %p320, %p321
      %p324 = scmp.ne.s32.totalorder %s307, %s323
      %p325 = scmp.eq.s32.totalorder %s33, 0
      %p326 = por %p324, %p325
      %s327 = ssub.s32 %s27, %s34
      %p328 = scmp.eq.s32.totalorder %s327, 0
      %s330 = sadd.s32 %s329, 1
      %s331 = scalar_select %p328, %s329, %s330
      %p334 = pneg %p328
      %p335 = scmp.eq.s32.totalorder %s27, 1
      %p336 = por %p334, %p335
      %p337 = scmp.ne.s32.totalorder %s329, %s332
      %p338 = scmp.eq.s32.totalorder %s27, 0
      %p339 = por %p337, %p338
      %p340 = scmp.ne.s32.totalorder %s329, %s332
      %p341 = scmp.eq.s32.totalorder %s32, 1
      %p342 = por %p340, %p341
      %p343 = scmp.ne.s32.totalorder %s332, %s333
      %p344 = scmp.eq.s32.totalorder %s32, 0
      %p345 = por %p343, %p344
      %p346 = scmp.ne.s32.totalorder %s332, %s333
      %p347 = scmp.eq.s32.totalorder %s33, 1
      %p348 = por %p346, %p347
      %p350 = scmp.ne.s32.totalorder %s333, %s349
      %p351 = scmp.eq.s32.totalorder %s33, 0
      %p352 = por %p350, %p351
      %s353 = ssub.s32 %s27, %s34
      %p354 = scmp.eq.s32.totalorder %s353, 0
      %s356 = sadd.s32 %s355, 1
      %s357 = scalar_select %p354, %s355, %s356
      %p360 = pneg %p354
      %p361 = scmp.eq.s32.totalorder %s27, 1
      %p362 = por %p360, %p361
      %p363 = scmp.ne.s32.totalorder %s355, %s358
      %p364 = scmp.eq.s32.totalorder %s27, 0
      %p365 = por %p363, %p364
      %p366 = scmp.ne.s32.totalorder %s355, %s358
      %p367 = scmp.eq.s32.totalorder %s32, 1
      %p368 = por %p366, %p367
      %p369 = scmp.ne.s32.totalorder %s358, %s359
      %p370 = scmp.eq.s32.totalorder %s32, 0
      %p371 = por %p369, %p370
      %p372 = scmp.ne.s32.totalorder %s358, %s359
      %p373 = scmp.eq.s32.totalorder %s33, 1
      %p374 = por %p372, %p373
      %p376 = scmp.ne.s32.totalorder %s359, %s375
      %p377 = scmp.eq.s32.totalorder %s33, 0
      %p378 = por %p376, %p377
      %s379 = ssub.s32 %s27, %s34
      %p380 = scmp.eq.s32.totalorder %s379, 0
      %s382 = sadd.s32 %s381, 1
      %s383 = scalar_select %p380, %s381, %s382
      %p386 = pneg %p380
      %p387 = scmp.eq.s32.totalorder %s27, 1
      %p388 = por %p386, %p387
      %p389 = scmp.ne.s32.totalorder %s381, %s384
      %p390 = scmp.eq.s32.totalorder %s27, 0
      %p391 = por %p389, %p390
      %p392 = scmp.ne.s32.totalorder %s381, %s384
      %p393 = scmp.eq.s32.totalorder %s32, 1
      %p394 = por %p392, %p393
      %p395 = scmp.ne.s32.totalorder %s384, %s385
      %p396 = scmp.eq.s32.totalorder %s32, 0
      %p397 = por %p395, %p396
      %p398 = scmp.ne.s32.totalorder %s384, %s385
      %p399 = scmp.eq.s32.totalorder %s33, 1
      %p400 = por %p398, %p399
      %p402 = scmp.ne.s32.totalorder %s385, %s401
      %p403 = scmp.eq.s32.totalorder %s33, 0
      %p404 = por %p402, %p403
      %s405 = ssub.s32 %s27, %s34
      %p406 = scmp.eq.s32.totalorder %s405, 0
      %s408 = sadd.s32 %s407, 1
      %s409 = scalar_select %p406, %s407, %s408
      %p412 = pneg %p406
      %p413 = scmp.eq.s32.totalorder %s27, 1
      %p414 = por %p412, %p413
      %p415 = scmp.ne.s32.totalorder %s407, %s410
      %p416 = scmp.eq.s32.totalorder %s27, 0
      %p417 = por %p415, %p416
      %p418 = scmp.ne.s32.totalorder %s407, %s410
      %p419 = scmp.eq.s32.totalorder %s32, 1
      %p420 = por %p418, %p419
      %p421 = scmp.ne.s32.totalorder %s410, %s411
      %p422 = scmp.eq.s32.totalorder %s32, 0
      %p423 = por %p421, %p422
      %p424 = scmp.ne.s32.totalorder %s410, %s411
      %p425 = scmp.eq.s32.totalorder %s33, 1
      %p426 = por %p424, %p425
      %p428 = scmp.ne.s32.totalorder %s411, %s427
      %p429 = scmp.eq.s32.totalorder %s33, 0
      %p430 = por %p428, %p429
      %s432 = sadd.s32 %s431, 1
      %p435 = scmp.eq.s32.totalorder %s27, 1
      %p436 = scmp.ne.s32.totalorder %s431, %s433
      %p437 = scmp.eq.s32.totalorder %s27, 0
      %p438 = por %p436, %p437
      %p439 = scmp.ne.s32.totalorder %s431, %s433
      %p440 = scmp.eq.s32.totalorder %s32, 1
      %p441 = por %p439, %p440
      %p442 = scmp.ne.s32.totalorder %s433, %s434
      %p443 = scmp.eq.s32.totalorder %s32, 0
      %p444 = por %p442, %p443
      %p445 = scmp.ne.s32.totalorder %s433, %s434
      %p446 = scmp.eq.s32.totalorder %s33, 1
      %p447 = por %p445, %p446
      %p449 = scmp.ne.s32.totalorder %s434, %s448
      %p450 = scmp.eq.s32.totalorder %s33, 0
      %p451 = por %p449, %p450
      %s453 = sadd.s32 %s452, 1
      %p456 = scmp.eq.s32.totalorder %s27, 1
      %p457 = scmp.ne.s32.totalorder %s452, %s454
      %p458 = scmp.eq.s32.totalorder %s27, 0
      %p459 = por %p457, %p458
      %p460 = scmp.ne.s32.totalorder %s452, %s454
      %p461 = scmp.eq.s32.totalorder %s32, 1
      %p462 = por %p460, %p461
      %p463 = scmp.ne.s32.totalorder %s454, %s455
      %p464 = scmp.eq.s32.totalorder %s32, 0
      %p465 = por %p463, %p464
      %p466 = scmp.ne.s32.totalorder %s454, %s455
      %p467 = scmp.eq.s32.totalorder %s33, 1
      %p468 = por %p466, %p467
      %p470 = scmp.ne.s32.totalorder %s455, %s469
      %p471 = scmp.eq.s32.totalorder %s33, 0
      %p472 = por %p470, %p471
      %s474 = sadd.s32 %s473, 1
      %p477 = scmp.eq.s32.totalorder %s27, 1
      %p478 = scmp.ne.s32.totalorder %s473, %s475
      %p479 = scmp.eq.s32.totalorder %s27, 0
      %p480 = por %p478, %p479
      %p481 = scmp.ne.s32.totalorder %s473, %s475
      %p482 = scmp.eq.s32.totalorder %s32, 1
      %p483 = por %p481, %p482
      %p484 = scmp.ne.s32.totalorder %s475, %s476
      %p485 = scmp.eq.s32.totalorder %s32, 0
      %p486 = por %p484, %p485
      %p487 = scmp.ne.s32.totalorder %s475, %s476
      %p488 = scmp.eq.s32.totalorder %s33, 1
      %p489 = por %p487, %p488
      %p491 = scmp.ne.s32.totalorder %s476, %s490
      %p492 = scmp.eq.s32.totalorder %s33, 0
      %p493 = por %p491, %p492
      %s495 = sadd.s32 %s494, 1
      %p498 = scmp.eq.s32.totalorder %s27, 1
      %p499 = scmp.ne.s32.totalorder %s494, %s496
      %p500 = scmp.eq.s32.totalorder %s27, 0
      %p501 = por %p499, %p500
      %p502 = scmp.ne.s32.totalorder %s494, %s496
      %p503 = scmp.eq.s32.totalorder %s32, 1
      %p504 = por %p502, %p503
      %p505 = scmp.ne.s32.totalorder %s496, %s497
      %p506 = scmp.eq.s32.totalorder %s32, 0
      %p507 = por %p505, %p506
      %p508 = scmp.ne.s32.totalorder %s496, %s497
      %p509 = scmp.eq.s32.totalorder %s33, 1
      %p510 = por %p508, %p509
      %p512 = scmp.ne.s32.totalorder %s497, %s511
      %p513 = scmp.eq.s32.totalorder %s33, 0
      %p514 = por %p512, %p513
      %s516 = sadd.s32 %s515, 1
      %p519 = scmp.eq.s32.totalorder %s27, 1
      %p520 = scmp.ne.s32.totalorder %s515, %s517
      %p521 = scmp.eq.s32.totalorder %s27, 0
      %p522 = por %p520, %p521
      %p523 = scmp.ne.s32.totalorder %s515, %s517
      %p524 = scmp.eq.s32.totalorder %s32, 1
      %p525 = por %p523, %p524
      %p526 = scmp.ne.s32.totalorder %s517, %s518
      %p527 = scmp.eq.s32.totalorder %s32, 0
      %p528 = por %p526, %p527
      %p529 = scmp.ne.s32.totalorder %s517, %s518
      %p530 = scmp.eq.s32.totalorder %s33, 1
      %p531 = por %p529, %p530
      %p533 = scmp.ne.s32.totalorder %s518, %s532
      %p534 = scmp.eq.s32.totalorder %s33, 0
      %p535 = por %p533, %p534
      %p536 = scmp.le.s32.totalorder 1, %s27
      %p537 = scmp.lt.s32.totalorder %s27, 3
      %p538 = pnand %p536, %p537
      %p539 = pneg %p538
      // Predicated region
      $region9: #{bert_class_forward.1} parent=5 // pred_check
        _
      $region10: #{bert_class_forward.1} parent=5 // pred_check_branch
        %541 = sbr.rel (%p538) target = $region12
      $region11: #{bert_class_forward.1} parent=5 // pred_region
        %s542 = ssub.s32 %s27, 1
        // Predicated region
        $region13: #{bert_class_forward.1} parent=11 // pred_check
          %p543 = pneg %p48
        $region14: #{bert_class_forward.1} parent=11 // pred_check_branch
          %545 = sbr.rel (%p543) target = $region16
        $region15: #{bert_class_forward.1} parent=11 // pred_region
          _
        $region16: #{bert_class_forward.1} parent=11 // pred_fallthru
          _
        // Predicated region
        $region17: #{bert_class_forward.1} parent=11 // pred_check
          %p546 = pneg %p69
        $region18: #{bert_class_forward.1} parent=11 // pred_check_branch
          %548 = sbr.rel (%p546) target = $region20
        $region19: #{bert_class_forward.1} parent=11 // pred_region
          _
        $region20: #{bert_class_forward.1} parent=11 // pred_fallthru
          _
        // Predicated region
        $region21: #{bert_class_forward.1} parent=11 // pred_check
          %p549 = pneg %p90
        $region22: #{bert_class_forward.1} parent=11 // pred_check_branch
          %551 = sbr.rel (%p549) target = $region24
        $region23: #{bert_class_forward.1} parent=11 // pred_region
          _
        $region24: #{bert_class_forward.1} parent=11 // pred_fallthru
          _
        // Predicated region
        $region25: #{bert_class_forward.1} parent=11 // pred_check
          %p552 = pneg %p111
        $region26: #{bert_class_forward.1} parent=11 // pred_check_branch
          %554 = sbr.rel (%p552) target = $region28
        $region27: #{bert_class_forward.1} parent=11 // pred_region
          _
        $region28: #{bert_class_forward.1} parent=11 // pred_fallthru
          _
        // Predicated region
        $region29: #{bert_class_forward.1} parent=11 // pred_check
          %p555 = pneg %p444
        $region30: #{bert_class_forward.1} parent=11 // pred_check_branch
          %557 = sbr.rel (%p555) target = $region32
        $region31: #{bert_class_forward.1} parent=11 // pred_region
          _
        $region32: #{bert_class_forward.1} parent=11 // pred_fallthru
          _
        // Predicated region
        $region33: #{bert_class_forward.1} parent=11 // pred_check
          %p558 = pneg %p465
        $region34: #{bert_class_forward.1} parent=11 // pred_check_branch
          %560 = sbr.rel (%p558) target = $region36
        $region35: #{bert_class_forward.1} parent=11 // pred_region
          _
        $region36: #{bert_class_forward.1} parent=11 // pred_fallthru
          _
        // Predicated region
        $region37: #{bert_class_forward.1} parent=11 // pred_check
          %p561 = pneg %p486
        $region38: #{bert_class_forward.1} parent=11 // pred_check_branch
          %563 = sbr.rel (%p561) target = $region40
        $region39: #{bert_class_forward.1} parent=11 // pred_region
          _
        $region40: #{bert_class_forward.1} parent=11 // pred_fallthru
          _
        // Predicated region
        $region41: #{bert_class_forward.1} parent=11 // pred_check
          %p564 = pneg %p507
        $region42: #{bert_class_forward.1} parent=11 // pred_check_branch
          %566 = sbr.rel (%p564) target = $region44
        $region43: #{bert_class_forward.1} parent=11 // pred_region
          _
        $region44: #{bert_class_forward.1} parent=11 // pred_fallthru
          _
      $region12: #{bert_class_forward.1} parent=5 // pred_fallthru
        _
      %p567 = scmp.lt.s32.totalorder %s27, 2
      // Predicated region
      $region45: #{bert_class_forward.1} parent=5 // pred_check
        %p568 = pneg %p567
      $region46: #{bert_class_forward.1} parent=5 // pred_check_branch
        %570 = sbr.rel (%p568) target = $region48
      $region47: #{bert_class_forward.1} parent=5 // pred_region
        // Predicated region
        $region49: #{bert_class_forward.1} parent=47 // pred_check
          %p571 = pneg %p131
        $region50: #{bert_class_forward.1} parent=47 // pred_check_branch
          %573 = sbr.rel (%p571) target = $region52
        $region51: #{bert_class_forward.1} parent=47 // pred_region
          %p574 = scmp.lt.s32.totalorder %s27, 1
          %s575 = scalar_select %p574, %s27, 1
          %s576 = smul.addr %s575, 4
          %s577 = smul.addr %s576, 4
          %s578 = scalar_lea.vmem %s4, %s577
        $region52: #{bert_class_forward.1} parent=47 // pred_fallthru
          _
        // Predicated region
        $region53: #{bert_class_forward.1} parent=47 // pred_check
          %p579 = pneg %p157
        $region54: #{bert_class_forward.1} parent=47 // pred_check_branch
          %581 = sbr.rel (%p579) target = $region56
        $region55: #{bert_class_forward.1} parent=47 // pred_region
          %p582 = scmp.lt.s32.totalorder %s27, 1
          %s583 = scalar_select %p582, %s27, 1
          %s584 = scalar_lea.vmem %s5, %s583
        $region56: #{bert_class_forward.1} parent=47 // pred_fallthru
          _
        // Predicated region
        $region57: #{bert_class_forward.1} parent=47 // pred_check
          %p585 = pneg %p183
        $region58: #{bert_class_forward.1} parent=47 // pred_check_branch
          %587 = sbr.rel (%p585) target = $region60
        $region59: #{bert_class_forward.1} parent=47 // pred_region
          %p588 = scmp.lt.s32.totalorder %s27, 1
          %s589 = scalar_select %p588, %s27, 1
          %s590 = smul.addr %s589, 4
          %s591 = smul.addr %s590, 4
          %s592 = scalar_lea.vmem %s6, %s591
        $region60: #{bert_class_forward.1} parent=47 // pred_fallthru
          _
        // Predicated region
        $region61: #{bert_class_forward.1} parent=47 // pred_check
          %p593 = pneg %p209
        $region62: #{bert_class_forward.1} parent=47 // pred_check_branch
          %595 = sbr.rel (%p593) target = $region64
        $region63: #{bert_class_forward.1} parent=47 // pred_region
          %p596 = scmp.lt.s32.totalorder %s27, 1
          %s597 = scalar_select %p596, %s27, 1
          %s598 = scalar_lea.vmem %s7, %s597
        $region64: #{bert_class_forward.1} parent=47 // pred_fallthru
          _
        // Predicated region
        $region65: #{bert_class_forward.1} parent=47 // pred_check
          %p599 = pneg %p235
        $region66: #{bert_class_forward.1} parent=47 // pred_check_branch
          %601 = sbr.rel (%p599) target = $region68
        $region67: #{bert_class_forward.1} parent=47 // pred_region
          %p602 = scmp.lt.s32.totalorder %s27, 1
          %s603 = scalar_select %p602, %s27, 1
          %s604 = scalar_lea.vmem %s8, %s603
        $region68: #{bert_class_forward.1} parent=47 // pred_fallthru
          _
        // Predicated region
        $region69: #{bert_class_forward.1} parent=47 // pred_check
          %p605 = pneg %p261
        $region70: #{bert_class_forward.1} parent=47 // pred_check_branch
          %607 = sbr.rel (%p605) target = $region72
        $region71: #{bert_class_forward.1} parent=47 // pred_region
          %p608 = scmp.lt.s32.totalorder %s27, 1
          %s609 = scalar_select %p608, %s27, 1
          %s610 = scalar_lea.vmem %s9, %s609
        $region72: #{bert_class_forward.1} parent=47 // pred_fallthru
          _
        // Predicated region
        $region73: #{bert_class_forward.1} parent=47 // pred_check
          %p611 = pneg %p287
        $region74: #{bert_class_forward.1} parent=47 // pred_check_branch
          %613 = sbr.rel (%p611) target = $region76
        $region75: #{bert_class_forward.1} parent=47 // pred_region
          %p614 = scmp.lt.s32.totalorder %s27, 1
          %s615 = scalar_select %p614, %s27, 1
          %s616 = smul.addr %s615, 4
          %s617 = smul.addr %s616, 4
          %s618 = scalar_lea.vmem %s10, %s617
        $region76: #{bert_class_forward.1} parent=47 // pred_fallthru
          _
        // Predicated region
        $region77: #{bert_class_forward.1} parent=47 // pred_check
          %p619 = pneg %p313
        $region78: #{bert_class_forward.1} parent=47 // pred_check_branch
          %621 = sbr.rel (%p619) target = $region80
        $region79: #{bert_class_forward.1} parent=47 // pred_region
          %p622 = scmp.lt.s32.totalorder %s27, 1
          %s623 = scalar_select %p622, %s27, 1
          %s624 = scalar_lea.vmem %s11, %s623
        $region80: #{bert_class_forward.1} parent=47 // pred_fallthru
          _
        // Predicated region
        $region81: #{bert_class_forward.1} parent=47 // pred_check
          %p625 = pneg %p339
        $region82: #{bert_class_forward.1} parent=47 // pred_check_branch
          %627 = sbr.rel (%p625) target = $region84
        $region83: #{bert_class_forward.1} parent=47 // pred_region
          %p628 = scmp.lt.s32.totalorder %s27, 1
          %s629 = scalar_select %p628, %s27, 1
          %s630 = smul.addr %s629, 16
          %s631 = smul.addr %s630, 4
          %s632 = scalar_lea.vmem %s12, %s631
        $region84: #{bert_class_forward.1} parent=47 // pred_fallthru
          _
        // Predicated region
        $region85: #{bert_class_forward.1} parent=47 // pred_check
          %p633 = pneg %p365
        $region86: #{bert_class_forward.1} parent=47 // pred_check_branch
          %635 = sbr.rel (%p633) target = $region88
        $region87: #{bert_class_forward.1} parent=47 // pred_region
          %p636 = scmp.lt.s32.totalorder %s27, 1
          %s637 = scalar_select %p636, %s27, 1
          %s638 = scalar_lea.vmem %s13, %s637
        $region88: #{bert_class_forward.1} parent=47 // pred_fallthru
          _
        // Predicated region
        $region89: #{bert_class_forward.1} parent=47 // pred_check
          %p639 = pneg %p391
        $region90: #{bert_class_forward.1} parent=47 // pred_check_branch
          %641 = sbr.rel (%p639) target = $region92
        $region91: #{bert_class_forward.1} parent=47 // pred_region
          %p642 = scmp.lt.s32.totalorder %s27, 1
          %s643 = scalar_select %p642, %s27, 1
          %s644 = scalar_lea.vmem %s14, %s643
        $region92: #{bert_class_forward.1} parent=47 // pred_fallthru
          _
        // Predicated region
        $region93: #{bert_class_forward.1} parent=47 // pred_check
          %p645 = pneg %p417
        $region94: #{bert_class_forward.1} parent=47 // pred_check_branch
          %647 = sbr.rel (%p645) target = $region96
        $region95: #{bert_class_forward.1} parent=47 // pred_region
          %p648 = scmp.lt.s32.totalorder %s27, 1
          %s649 = scalar_select %p648, %s27, 1
          %s650 = scalar_lea.vmem %s15, %s649
        $region96: #{bert_class_forward.1} parent=47 // pred_fallthru
          _
      $region48: #{bert_class_forward.1} parent=5 // pred_fallthru
        _
      %p651 = scmp.le.s32.totalorder 1, %s27
      %p652 = scmp.lt.s32.totalorder %s27, 3
      %p653 = pnand %p651, %p652
      %p654 = pneg %p653
      // Predicated region
      $region97: #{bert_class_forward.1} parent=5 // pred_check
        _
      $region98: #{bert_class_forward.1} parent=5 // pred_check_branch
        %656 = sbr.rel (%p653) target = $region100
      $region99: #{bert_class_forward.1} parent=5 // pred_region
        %s657 = ssub.s32 %s27, 1
        %p658 = pneg %p48
        %p659 = pneg %p45
        %p660 = pneg %p69
        %p661 = pneg %p66
        %p662 = pneg %p90
        %p663 = pneg %p87
        %p664 = pneg %p111
        %p665 = pneg %p108
        %p666 = scmp.lt.s32.totalorder %s32, 1
        %s667 = scalar_select %p666, %s32, 1
        %s668 = smul.addr %s667, 4
        %s669 = smul.addr %s668, 4
        %s670 = scalar_lea.vmem %s4, %s669
        %p671 = pneg %p137
        %p672 = pneg %p134
        %p673 = scmp.lt.s32.totalorder %s32, 1
        %s674 = scalar_select %p673, %s32, 1
        %s675 = scalar_lea.vmem %s5, %s674
        %p676 = pneg %p163
        %p677 = pneg %p160
        %p678 = scmp.lt.s32.totalorder %s32, 1
        %s679 = scalar_select %p678, %s32, 1
        %s680 = smul.addr %s679, 4
        %s681 = smul.addr %s680, 4
        %s682 = scalar_lea.vmem %s6, %s681
        %p683 = pneg %p189
        %p684 = pneg %p186
        %p685 = scmp.lt.s32.totalorder %s32, 1
        %s686 = scalar_select %p685, %s32, 1
        %s687 = scalar_lea.vmem %s7, %s686
        %p688 = pneg %p215
        %p689 = pneg %p212
        %p690 = scmp.lt.s32.totalorder %s32, 1
        %s691 = scalar_select %p690, %s32, 1
        %s692 = scalar_lea.vmem %s8, %s691
        %p693 = pneg %p241
        %p694 = pneg %p238
        %p695 = scmp.lt.s32.totalorder %s32, 1
        %s696 = scalar_select %p695, %s32, 1
        %s697 = scalar_lea.vmem %s9, %s696
        %p698 = pneg %p267
        %p699 = pneg %p264
        %p700 = scmp.lt.s32.totalorder %s32, 1
        %s701 = scalar_select %p700, %s32, 1
        %s702 = smul.addr %s701, 4
        %s703 = smul.addr %s702, 4
        %s704 = scalar_lea.vmem %s10, %s703
        %p705 = pneg %p293
        %p706 = pneg %p290
        %p707 = scmp.lt.s32.totalorder %s32, 1
        %s708 = scalar_select %p707, %s32, 1
        %s709 = scalar_lea.vmem %s11, %s708
        %p710 = pneg %p319
        %p711 = pneg %p316
        %p712 = scmp.lt.s32.totalorder %s32, 1
        %s713 = scalar_select %p712, %s32, 1
        %s714 = smul.addr %s713, 16
        %s715 = smul.addr %s714, 4
        %s716 = scalar_lea.vmem %s12, %s715
        %p717 = pneg %p345
        %p718 = pneg %p342
        %p719 = scmp.lt.s32.totalorder %s32, 1
        %s720 = scalar_select %p719, %s32, 1
        %s721 = scalar_lea.vmem %s13, %s720
        %p722 = pneg %p371
        %p723 = pneg %p368
        %p724 = scmp.lt.s32.totalorder %s32, 1
        %s725 = scalar_select %p724, %s32, 1
        %s726 = scalar_lea.vmem %s14, %s725
        %p727 = pneg %p397
        %p728 = pneg %p394
        %p729 = scmp.lt.s32.totalorder %s32, 1
        %s730 = scalar_select %p729, %s32, 1
        %s731 = scalar_lea.vmem %s15, %s730
        %p732 = pneg %p423
        %p733 = pneg %p420
        %p734 = pneg %p444
        %p735 = pneg %p441
        %p736 = pneg %p465
        %p737 = pneg %p462
        %p738 = pneg %p486
        %p739 = pneg %p483
        %p740 = pneg %p507
        %p741 = pneg %p504
        %p742 = pneg %p528
        %p743 = pneg %p525
        %p744 = scmp.lt.s32.totalorder %s32, 1
        %s745 = scalar_select %p744, %s32, 1
        %s746 = smul.addr %s745, 4
        %s747 = smul.addr %s746, 4
        %s748 = scalar_lea.vmem %s4, %s747
        %p749 = scmp.lt.s32.totalorder %s32, 1
        %s750 = scalar_select %p749, %s32, 1
        %s751 = scalar_lea.vmem %s5, %s750
        %p752 = scmp.lt.s32.totalorder %s32, 1
        %s753 = scalar_select %p752, %s32, 1
        %s754 = smul.addr %s753, 4
        %s755 = smul.addr %s754, 4
        %s756 = scalar_lea.vmem %s6, %s755
        %p757 = scmp.lt.s32.totalorder %s32, 1
        %s758 = scalar_select %p757, %s32, 1
        %s759 = scalar_lea.vmem %s7, %s758
        %p760 = scmp.lt.s32.totalorder %s32, 1
        %s761 = scalar_select %p760, %s32, 1
        %s762 = scalar_lea.vmem %s8, %s761
        %p763 = scmp.lt.s32.totalorder %s32, 1
        %s764 = scalar_select %p763, %s32, 1
        %s765 = scalar_lea.vmem %s9, %s764
        %p766 = scmp.lt.s32.totalorder %s32, 1
        %s767 = scalar_select %p766, %s32, 1
        %s768 = smul.addr %s767, 4
        %s769 = smul.addr %s768, 4
        %s770 = scalar_lea.vmem %s10, %s769
        %p771 = scmp.lt.s32.totalorder %s32, 1
        %s772 = scalar_select %p771, %s32, 1
        %s773 = scalar_lea.vmem %s11, %s772
        %p774 = scmp.lt.s32.totalorder %s32, 1
        %s775 = scalar_select %p774, %s32, 1
        %s776 = smul.addr %s775, 16
        %s777 = smul.addr %s776, 4
        %s778 = scalar_lea.vmem %s12, %s777
        %p779 = scmp.lt.s32.totalorder %s32, 1
        %s780 = scalar_select %p779, %s32, 1
        %s781 = scalar_lea.vmem %s13, %s780
        %p782 = scmp.lt.s32.totalorder %s32, 1
        %s783 = scalar_select %p782, %s32, 1
        %s784 = scalar_lea.vmem %s14, %s783
        %p785 = scmp.lt.s32.totalorder %s32, 1
        %s786 = scalar_select %p785, %s32, 1
        %s787 = scalar_lea.vmem %s15, %s786
        %p789 = scmp.eq.s32.totalorder %s32, 0
        // Predicated region
        $region101: #{bert_class_forward.1} parent=99 // pred_check
          %p790 = pneg %p789
        $region102: #{bert_class_forward.1} parent=99 // pred_check_branch
          %792 = sbr.rel (%p790) target = $region104
        $region103: #{bert_class_forward.1} parent=99 // pred_region
          %v793 = vld [vmem:[%s0] sm:$0xff]
          %v794 = vld [vmem:[%s0 + $0x8] sm:$0xff]
          %v795 = vld [vmem:[%s2] sm:$0x1]
          %v796 = vld [vmem:[%s3] sm:$0x1]
          %vm797 = vcmask 261120
          %v798 = vsel %vm797, %v793, 0.0
          %799 = vadd.xlane.f32.xlu0 %v798
          %v800 = vpop.xlane.xlu0 %799
          %v801 = vsel %vm797, %v794, 0.0
          %802 = vadd.xlane.f32.xlu0 %v801
          %v803 = vpop.xlane.xlu0 %802
          %v804 = vrcp.pop 32.0
          %v805 = vmul.f32 %v800, %v804
          %v806 = vmul.f32 %v803, %v804
          %v807 = vsub.f32 %v793, %v805
          %v808 = vsub.f32 %v794, %v806
          %v809 = vmul.f32 %v807, %v807
          %v810 = vmul.f32 %v808, %v808
          %v811 = vsel %vm797, %v809, 0.0
          %812 = vadd.xlane.f32.xlu0 %v811
          %v813 = vpop.xlane.xlu0 %812
          %v814 = vsel %vm797, %v810, 0.0
          %815 = vadd.xlane.f32.xlu0 %v814
          %v816 = vpop.xlane.xlu0 %815
          %v817 = vmul.f32 %v813, %v804
          %v818 = vmul.f32 %v816, %v804
          %v819 = vadd.f32 %v817, 1e-12
          %v820 = vadd.f32 %v818, 1e-12
          %v821 = vrsqrt.pop %v819
          %v822 = vrsqrt.pop %v820
          %v823 = vmul.f32 %v807, %v821
          %v824 = vmul.f32 %v808, %v822
          %v826 = vlaneseq
          %v827 = vshrl.u32 %v826, 7
          %v828 = vsub.s32 0, %v827
          %v829 = vrot.slane %v795, %v828
          %v831 = vmul.f32 %v823, %v829
          %v832 = vmul.f32 %v824, %v829
          %v834 = vlaneseq
          %v835 = vshrl.u32 %v834, 7
          %v836 = vsub.s32 0, %v835
          %v837 = vrot.slane %v796, %v836
          %v839 = vadd.f32 %v831, %v837
          %v840 = vadd.f32 %v832, %v837
          %841 = vst.msk [vmem:[#allocation2] sm:$0xff] %vm797, %v839
          %842 = vst.msk [vmem:[#allocation2 + $0x8] sm:$0xff] %vm797, %v840
        $region104: #{bert_class_forward.1} parent=99 // pred_fallthru
          _
        %v843 = vld [vmem:[#allocation2] sm:$0xff]
        %v844 = vld [vmem:[#allocation2 + $0x8] sm:$0xff]
        %v845 = vld [vmem:[%s748] sm:$0xf]
        %v846 = vld [vmem:[%s748 + $0x4] sm:$0xf]
        %v847 = vld [vmem:[%s748 + $0x8] sm:$0xf]
        %v848 = vld [vmem:[%s748 + $0xc] sm:$0xf]
        %v849 = vpack.c.bf16 %v844, %v843
        %v850 = vld [vmem:[%s751] sm:$0x1]
        %v852 = vlaneseq
        %v853 = vshrl.u32 %v852, 7
        %v854 = vsub.s32 0, %v853
        %v855 = vrot.slane %v850, %v854
        %v861 = vunpack.c.l.b16 %v845
        %v862 = vunpack.c.l.b16 %v846
        %v863 = vunpack.c.l.b16 %v847
        %v864 = vunpack.c.l.b16 %v848
        %v865 = vpack.c.b16 %v862, %v861
        %v866 = vpack.c.b16 %v864, %v863
        %vm869 = vcmask 261120
        %v871 = vsel %vm869, %v849, 0
        %873 = vmatprep.subr.bf16.mxu0 0
        %874 = vmatpush1.bf16.msra.mxu0 0
        %875 = vmatprep.subr.bf16.mxu0 0
        %876 = vmatpush1.bf16.msra.mxu0 0
        %877 = vmatprep.subr.bf16.mxu0 0
        %878 = vmatpush1.bf16.msra.mxu0 0
        %879 = vmatprep.subr.bf16.mxu0 0
        %880 = vmatpush1.bf16.msra.mxu0 0
        %881 = vmatprep.subr.bf16.mxu0 0
        %882 = vmatpush1.bf16.msra.mxu0 0
        %883 = vmatprep.subr.bf16.mxu0 0
        %884 = vmatpush1.bf16.msra.mxu0 0
        %885 = vmatprep.subr.bf16.mxu0 0
        %886 = vmatpush1.bf16.msra.mxu0 %v866
        %887 = vmatprep.subr.bf16.mxu0 0
        %888 = vmatpush1.bf16.msra.mxu0 %v865
        %889 = vmatprep.subr.bf16.mxu0 0
        %890 = vmatpush2.bf16.msra.mxu0 0
        %891 = vmatprep.subr.bf16.mxu0 0
        %892 = vmatpush2.bf16.msra.mxu0 0
        %893 = vmatprep.subr.bf16.mxu0 0
        %894 = vmatpush2.bf16.msra.mxu0 0
        %895 = vmatprep.subr.bf16.mxu0 0
        %896 = vmatpush2.bf16.msra.mxu0 0
        %897 = vmatprep.subr.bf16.mxu0 0
        %898 = vmatpush2.bf16.msra.mxu0 0
        %899 = vmatprep.subr.bf16.mxu0 0
        %900 = vmatpush2.bf16.msra.mxu0 0
        %901 = vmatprep.subr.bf16.mxu0 0
        %902 = vmatpush2.bf16.msra.mxu0 0
        %903 = vmatprep.subr.bf16.mxu0 0
        %904 = vmatpush2.bf16.msra.mxu0 0
        %905 = vmatprep.mubr.bf16.mxu0 0
        %906 = vmatmul.mubr.bf16.gmra.mxu0 %v871
        %v907 = vpop.f32.mrf.mxu0
        %v908 = vadd.f32 %v855, %v907
        %v909 = vpop.f32.mrf.mxu0
        %v910 = vpop.f32.mrf.mxu0
        %v911 = vadd.f32 %v855, %v910
        %v912 = vpop.f32.mrf.mxu0
        %913 = vdwg.mxu0
        %v914 = vld [vmem:[%s1] sm:$0x3]
        %v917 = vunpack.c.l.s4 1966171168
        %v918 = vunpack.c.0.s8 %v917
        %v919 = vlaneseq
        %v920 = vshrl.u32 %v919, 7
        %v921 = vsub.s32 %v918, %v920
        %v922 = vrot.slane %v914, %v921
        %v923 = vcombine.high %v922, %v922
        %v925 = vunpack.c.l.s4 1966171168
        %v926 = vunpack.c.0.s8 %v925
        %v927 = vlaneseq
        %v928 = vshrl.u32 %v927, 7
        %v929 = vsub.s32 %v926, %v928
        %v930 = vrot.slane %v922, %v929
        %v932 = vunpack.c.l.s4 1966171168
        %v933 = vunpack.c.0.s8 %v932
        %v934 = vlaneseq
        %v935 = vshrl.u32 %v934, 7
        %v936 = vsub.s32 %v933, %v935
        %v937 = vrot.slane %v923, %v936
        %v938 = vpack.c.bf16 %v908, %v908
        %v939 = vpack.c.bf16 %v911, %v911
        %941 = vrot.lane.b32.xlu0 %v938, 96
        %v942 = vpop.permute.xlu0 %941
        %vm943 = vcmask 64512
        %v945 = vsel %vm943, %v938, 0
        %v948 = vsel %vm943, %v942, 0
        %950 = vmatprep.subr.bf16.mxu0 0
        %951 = vmatpush1.bf16.xpose.msra.mxu0 0
        %952 = vmatprep.subr.bf16.mxu0 0
        %953 = vmatpush1.bf16.xpose.msra.mxu0 0
        %954 = vmatprep.subr.bf16.mxu0 0
        %955 = vmatpush1.bf16.xpose.msra.mxu0 0
        %956 = vmatprep.subr.bf16.mxu0 0
        %957 = vmatpush1.bf16.xpose.msra.mxu0 0
        %958 = vmatprep.subr.bf16.mxu0 0
        %959 = vmatpush1.bf16.xpose.msra.mxu0 0
        %960 = vmatprep.subr.bf16.mxu0 0
        %961 = vmatpush1.bf16.xpose.msra.mxu0 0
        %962 = vmatprep.subr.bf16.mxu0 0
        %963 = vmatpush1.bf16.xpose.msra.mxu0 0
        %964 = vmatprep.subr.bf16.mxu0 0
        %965 = vmatpush1.bf16.xpose.msra.mxu0 %v948
        %966 = vmatprep.subr.bf16.mxu0 0
        %967 = vmatpush2.bf16.xpose.msra.mxu0 0
        %968 = vmatprep.subr.bf16.mxu0 0
        %969 = vmatpush2.bf16.xpose.msra.mxu0 0
        %970 = vmatprep.subr.bf16.mxu0 0
        %971 = vmatpush2.bf16.xpose.msra.mxu0 0
        %972 = vmatprep.subr.bf16.mxu0 0
        %973 = vmatpush2.bf16.xpose.msra.mxu0 0
        %974 = vmatprep.subr.bf16.mxu0 0
        %975 = vmatpush2.bf16.xpose.msra.mxu0 0
        %976 = vmatprep.subr.bf16.mxu0 0
        %977 = vmatpush2.bf16.xpose.msra.mxu0 0
        %978 = vmatprep.subr.bf16.mxu0 0
        %979 = vmatpush2.bf16.xpose.msra.mxu0 0
        %980 = vmatprep.subr.bf16.mxu0 0
        %981 = vmatpush2.bf16.xpose.msra.mxu0 0
        %982 = vmatprep.mubr.bf16.mxu0 0
        %983 = vmatmul.mubr.bf16.gmra.mxu0 %v945
        %v984 = vpop.f32.mrf.mxu0
        %v985 = vadd.f32 0.0, %v984
        %v986 = vpop.f32.mrf.mxu0
        %v987 = vpop.f32.mrf.mxu0
        %v988 = vpop.f32.mrf.mxu0
        %989 = vdwg.mxu0
        %991 = vrot.lane.b32.xlu0 %v939, 96
        %v992 = vpop.permute.xlu0 %991
        %v994 = vsel %vm943, %v939, 0
        %v997 = vsel %vm943, %v992, 0
        %999 = vmatprep.subr.bf16.mxu0 0
        %1000 = vmatpush1.bf16.xpose.msra.mxu0 0
        %1001 = vmatprep.subr.bf16.mxu0 0
        %1002 = vmatpush1.bf16.xpose.msra.mxu0 0
        %1003 = vmatprep.subr.bf16.mxu0 0
        %1004 = vmatpush1.bf16.xpose.msra.mxu0 0
        %1005 = vmatprep.subr.bf16.mxu0 0
        %1006 = vmatpush1.bf16.xpose.msra.mxu0 0
        %1007 = vmatprep.subr.bf16.mxu0 0
        %1008 = vmatpush1.bf16.xpose.msra.mxu0 0
        %1009 = vmatprep.subr.bf16.mxu0 0
        %1010 = vmatpush1.bf16.xpose.msra.mxu0 0
        %1011 = vmatprep.subr.bf16.mxu0 0
        %1012 = vmatpush1.bf16.xpose.msra.mxu0 0
        %1013 = vmatprep.subr.bf16.mxu0 0
        %1014 = vmatpush1.bf16.xpose.msra.mxu0 %v997
        %1015 = vmatprep.subr.bf16.mxu0 0
        %1016 = vmatpush2.bf16.xpose.msra.mxu0 0
        %1017 = vmatprep.subr.bf16.mxu0 0
        %1018 = vmatpush2.bf16.xpose.msra.mxu0 0
        %1019 = vmatprep.subr.bf16.mxu0 0
        %1020 = vmatpush2.bf16.xpose.msra.mxu0 0
        %1021 = vmatprep.subr.bf16.mxu0 0
        %1022 = vmatpush2.bf16.xpose.msra.mxu0 0
        %1023 = vmatprep.subr.bf16.mxu0 0
        %1024 = vmatpush2.bf16.xpose.msra.mxu0 0
        %1025 = vmatprep.subr.bf16.mxu0 0
        %1026 = vmatpush2.bf16.xpose.msra.mxu0 0
        %1027 = vmatprep.subr.bf16.mxu0 0
        %1028 = vmatpush2.bf16.xpose.msra.mxu0 0
        %1029 = vmatprep.subr.bf16.mxu0 0
        %1030 = vmatpush2.bf16.xpose.msra.mxu0 0
        %1031 = vmatprep.mubr.bf16.mxu0 0
        %1032 = vmatmul.mubr.bf16.gmra.mxu0 %v994
        %v1033 = vpop.f32.mrf.mxu0
        %v1034 = vadd.f32 0.0, %v1033
        %v1035 = vpop.f32.mrf.mxu0
        %v1036 = vpop.f32.mrf.mxu0
        %v1037 = vpop.f32.mrf.mxu0
        %1038 = vdwg.mxu0
        %v1039 = vmul.f32 %v985, 0.35355338
        %v1040 = vmul.f32 %v1034, 0.35355338
        %v1041 = vlaneseq
        %v1042 = vshrl.u32 %v1041, 7
        %v1043 = vsub.s32 0, %v1042
        %v1044 = vrot.slane %v930, %v1043
        %v1045 = vlaneseq
        %v1046 = vshrl.u32 %v1045, 7
        %v1047 = vsub.s32 0, %v1046
        %v1048 = vrot.slane %v937, %v1047
        %v1051 = vadd.f32 %v1039, %v1044
        %v1052 = vadd.f32 %v1040, %v1048
        %v1053 = vsel %vm943, %v1051, -inf
        %1054 = vmax.xlane.f32.xlu0 %v1053
        %v1055 = vpop.xlane.xlu0 %1054
        %v1056 = vsel %vm943, %v1052, -inf
        %1057 = vmax.xlane.f32.xlu0 %v1056
        %v1058 = vpop.xlane.xlu0 %1057
        %v1059 = vsub.f32 %v1051, %v1055
        %v1060 = vsub.f32 %v1052, %v1058
        %v1061 = vmul.f32 %v1059, 1.442695
        %v1062 = vpow.pop %v1061
        %v1063 = vmul.f32 %v1060, 1.442695
        %v1064 = vpow.pop %v1063
        %v1065 = vsel %vm943, %v1062, 0.0
        %1066 = vadd.xlane.f32.xlu0 %v1065
        %v1067 = vpop.xlane.xlu0 %1066
        %v1068 = vsel %vm943, %v1064, 0.0
        %1069 = vadd.xlane.f32.xlu0 %v1068
        %v1070 = vpop.xlane.xlu0 %1069
        %v1071 = vrcp.pop %v1067
        %v1072 = vrcp.pop %v1070
        %v1073 = vmul.f32 %v1062, %v1071
        %v1074 = vmul.f32 %v1064, %v1072
        %v1075 = vpack.c.bf16 %v1073, %v1073
        %v1076 = vpack.c.bf16 %v1074, %v1074
        %1077 = vrot.lane.b32.xlu0 %v938, 64
        %v1078 = vpop.permute.xlu0 %1077
        %v1080 = vsel %vm943, %v1075, 0
        %vm1082 = vcmask 1043456
        %v1084 = vsel %vm1082, %v1078, 0
        %1086 = vmatprep.subr.bf16.mxu0 0
        %1087 = vmatpush1.bf16.msra.mxu0 0
        %1088 = vmatprep.subr.bf16.mxu0 0
        %1089 = vmatpush1.bf16.msra.mxu0 0
        %1090 = vmatprep.subr.bf16.mxu0 0
        %1091 = vmatpush1.bf16.msra.mxu0 0
        %1092 = vmatprep.subr.bf16.mxu0 0
        %1093 = vmatpush1.bf16.msra.mxu0 0
        %1094 = vmatprep.subr.bf16.mxu0 0
        %1095 = vmatpush1.bf16.msra.mxu0 0
        %1096 = vmatprep.subr.bf16.mxu0 0
        %1097 = vmatpush1.bf16.msra.mxu0 0
        %1098 = vmatprep.subr.bf16.mxu0 0
        %1099 = vmatpush1.bf16.msra.mxu0 0
        %1100 = vmatprep.subr.bf16.mxu0 0
        %1101 = vmatpush1.bf16.msra.mxu0 %v1084
        %1102 = vmatprep.subr.bf16.mxu0 0
        %1103 = vmatpush2.bf16.msra.mxu0 0
        %1104 = vmatprep.subr.bf16.mxu0 0
        %1105 = vmatpush2.bf16.msra.mxu0 0
        %1106 = vmatprep.subr.bf16.mxu0 0
        %1107 = vmatpush2.bf16.msra.mxu0 0
        %1108 = vmatprep.subr.bf16.mxu0 0
        %1109 = vmatpush2.bf16.msra.mxu0 0
        %1110 = vmatprep.subr.bf16.mxu0 0
        %1111 = vmatpush2.bf16.msra.mxu0 0
        %1112 = vmatprep.subr.bf16.mxu0 0
        %1113 = vmatpush2.bf16.msra.mxu0 0
        %1114 = vmatprep.subr.bf16.mxu0 0
        %1115 = vmatpush2.bf16.msra.mxu0 0
        %1116 = vmatprep.subr.bf16.mxu0 0
        %1117 = vmatpush2.bf16.msra.mxu0 0
        %1118 = vmatprep.mubr.bf16.mxu0 0
        %1119 = vmatmul.mubr.bf16.gmra.mxu0 %v1080
        %v1120 = vpop.f32.mrf.mxu0
        %v1121 = vadd.f32 0.0, %v1120
        %v1122 = vpop.f32.mrf.mxu0
        %v1123 = vpop.f32.mrf.mxu0
        %v1124 = vpop.f32.mrf.mxu0
        %1125 = vdwg.mxu0
        %1126 = vrot.lane.b32.xlu0 %v939, 64
        %v1127 = vpop.permute.xlu0 %1126
        %v1129 = vsel %vm943, %v1076, 0
        %v1132 = vsel %vm1082, %v1127, 0
        %1134 = vmatprep.subr.bf16.mxu0 0
        %1135 = vmatpush1.bf16.msra.mxu0 0
        %1136 = vmatprep.subr.bf16.mxu0 0
        %1137 = vmatpush1.bf16.msra.mxu0 0
        %1138 = vmatprep.subr.bf16.mxu0 0
        %1139 = vmatpush1.bf16.msra.mxu0 0
        %1140 = vmatprep.subr.bf16.mxu0 0
        %1141 = vmatpush1.bf16.msra.mxu0 0
        %1142 = vmatprep.subr.bf16.mxu0 0
        %1143 = vmatpush1.bf16.msra.mxu0 0
        %1144 = vmatprep.subr.bf16.mxu0 0
        %1145 = vmatpush1.bf16.msra.mxu0 0
        %1146 = vmatprep.subr.bf16.mxu0 0
        %1147 = vmatpush1.bf16.msra.mxu0 0
        %1148 = vmatprep.subr.bf16.mxu0 0
        %1149 = vmatpush1.bf16.msra.mxu0 %v1132
        %1150 = vmatprep.subr.bf16.mxu0 0
        %1151 = vmatpush2.bf16.msra.mxu0 0
        %1152 = vmatprep.subr.bf16.mxu0 0
        %1153 = vmatpush2.bf16.msra.mxu0 0
        %1154 = vmatprep.subr.bf16.mxu0 0
        %1155 = vmatpush2.bf16.msra.mxu0 0
        %1156 = vmatprep.subr.bf16.mxu0 0
        %1157 = vmatpush2.bf16.msra.mxu0 0
        %1158 = vmatprep.subr.bf16.mxu0 0
        %1159 = vmatpush2.bf16.msra.mxu0 0
        %1160 = vmatprep.subr.bf16.mxu0 0
        %1161 = vmatpush2.bf16.msra.mxu0 0
        %1162 = vmatprep.subr.bf16.mxu0 0
        %1163 = vmatpush2.bf16.msra.mxu0 0
        %1164 = vmatprep.subr.bf16.mxu0 0
        %1165 = vmatpush2.bf16.msra.mxu0 0
        %1166 = vmatprep.mubr.bf16.mxu0 0
        %1167 = vmatmul.mubr.bf16.gmra.mxu0 %v1129
        %v1168 = vpop.f32.mrf.mxu0
        %v1169 = vadd.f32 0.0, %v1168
        %v1170 = vpop.f32.mrf.mxu0
        %v1171 = vpop.f32.mrf.mxu0
        %v1172 = vpop.f32.mrf.mxu0
        %1173 = vdwg.mxu0
        %1174 = vrot.lane.b32.xlu0 %v938, 120
        %v1175 = vpop.permute.xlu0 %1174
        %1176 = vrot.lane.b32.xlu0 %v938, 88
        %v1177 = vpop.permute.xlu0 %1176
        %v1179 = vsel %vm943, %v1175, 0
        %v1182 = vsel %vm943, %v1177, 0
        %1184 = vmatprep.subr.bf16.mxu0 0
        %1185 = vmatpush1.bf16.xpose.msra.mxu0 0
        %1186 = vmatprep.subr.bf16.mxu0 0
        %1187 = vmatpush1.bf16.xpose.msra.mxu0 0
        %1188 = vmatprep.subr.bf16.mxu0 0
        %1189 = vmatpush1.bf16.xpose.msra.mxu0 0
        %1190 = vmatprep.subr.bf16.mxu0 0
        %1191 = vmatpush1.bf16.xpose.msra.mxu0 0
        %1192 = vmatprep.subr.bf16.mxu0 0
        %1193 = vmatpush1.bf16.xpose.msra.mxu0 0
        %1194 = vmatprep.subr.bf16.mxu0 0
        %1195 = vmatpush1.bf16.xpose.msra.mxu0 0
        %1196 = vmatprep.subr.bf16.mxu0 0
        %1197 = vmatpush1.bf16.xpose.msra.mxu0 0
        %1198 = vmatprep.subr.bf16.mxu0 0
        %1199 = vmatpush1.bf16.xpose.msra.mxu0 %v1182
        %1200 = vmatprep.subr.bf16.mxu0 0
        %1201 = vmatpush2.bf16.xpose.msra.mxu0 0
        %1202 = vmatprep.subr.bf16.mxu0 0
        %1203 = vmatpush2.bf16.xpose.msra.mxu0 0
        %1204 = vmatprep.subr.bf16.mxu0 0
        %1205 = vmatpush2.bf16.xpose.msra.mxu0 0
        %1206 = vmatprep.subr.bf16.mxu0 0
        %1207 = vmatpush2.bf16.xpose.msra.mxu0 0
        %1208 = vmatprep.subr.bf16.mxu0 0
        %1209 = vmatpush2.bf16.xpose.msra.mxu0 0
        %1210 = vmatprep.subr.bf16.mxu0 0
        %1211 = vmatpush2.bf16.xpose.msra.mxu0 0
        %1212 = vmatprep.subr.bf16.mxu0 0
        %1213 = vmatpush2.bf16.xpose.msra.mxu0 0
        %1214 = vmatprep.subr.bf16.mxu0 0
        %1215 = vmatpush2.bf16.xpose.msra.mxu0 0
        %1216 = vmatprep.mubr.bf16.mxu0 0
        %1217 = vmatmul.mubr.bf16.gmra.mxu0 %v1179
        %v1218 = vpop.f32.mrf.mxu0
        %v1219 = vadd.f32 0.0, %v1218
        %v1220 = vpop.f32.mrf.mxu0
        %v1221 = vpop.f32.mrf.mxu0
        %v1222 = vpop.f32.mrf.mxu0
        %1223 = vdwg.mxu0
        %1224 = vrot.lane.b32.xlu0 %v939, 120
        %v1225 = vpop.permute.xlu0 %1224
        %1226 = vrot.lane.b32.xlu0 %v939, 88
        %v1227 = vpop.permute.xlu0 %1226
        %v1229 = vsel %vm943, %v1225, 0
        %v1232 = vsel %vm943, %v1227, 0
        %1234 = vmatprep.subr.bf16.mxu0 0
        %1235 = vmatpush1.bf16.xpose.msra.mxu0 0
        %1236 = vmatprep.subr.bf16.mxu0 0
        %1237 = vmatpush1.bf16.xpose.msra.mxu0 0
        %1238 = vmatprep.subr.bf16.mxu0 0
        %1239 = vmatpush1.bf16.xpose.msra.mxu0 0
        %1240 = vmatprep.subr.bf16.mxu0 0
        %1241 = vmatpush1.bf16.xpose.msra.mxu0 0
        %1242 = vmatprep.subr.bf16.mxu0 0
        %1243 = vmatpush1.bf16.xpose.msra.mxu0 0
        %1244 = vmatprep.subr.bf16.mxu0 0
        %1245 = vmatpush1.bf16.xpose.msra.mxu0 0
        %1246 = vmatprep.subr.bf16.mxu0 0
        %1247 = vmatpush1.bf16.xpose.msra.mxu0 0
        %1248 = vmatprep.subr.bf16.mxu0 0
        %1249 = vmatpush1.bf16.xpose.msra.mxu0 %v1232
        %1250 = vmatprep.subr.bf16.mxu0 0
        %1251 = vmatpush2.bf16.xpose.msra.mxu0 0
        %1252 = vmatprep.subr.bf16.mxu0 0
        %1253 = vmatpush2.bf16.xpose.msra.mxu0 0
        %1254 = vmatprep.subr.bf16.mxu0 0
        %1255 = vmatpush2.bf16.xpose.msra.mxu0 0
        %1256 = vmatprep.subr.bf16.mxu0 0
        %1257 = vmatpush2.bf16.xpose.msra.mxu0 0
        %1258 = vmatprep.subr.bf16.mxu0 0
        %1259 = vmatpush2.bf16.xpose.msra.mxu0 0
        %1260 = vmatprep.subr.bf16.mxu0 0
        %1261 = vmatpush2.bf16.xpose.msra.mxu0 0
        %1262 = vmatprep.subr.bf16.mxu0 0
        %1263 = vmatpush2.bf16.xpose.msra.mxu0 0
        %1264 = vmatprep.subr.bf16.mxu0 0
        %1265 = vmatpush2.bf16.xpose.msra.mxu0 0
        %1266 = vmatprep.mubr.bf16.mxu0 0
        %1267 = vmatmul.mubr.bf16.gmra.mxu0 %v1229
        %v1268 = vpop.f32.mrf.mxu0
        %v1269 = vadd.f32 0.0, %v1268
        %v1270 = vpop.f32.mrf.mxu0
        %v1271 = vpop.f32.mrf.mxu0
        %v1272 = vpop.f32.mrf.mxu0
        %1273 = vdwg.mxu0
        %v1274 = vmul.f32 %v1219, 0.35355338
        %v1275 = vmul.f32 %v1269, 0.35355338
        %v1276 = vadd.f32 %v1274, %v1044
        %v1277 = vadd.f32 %v1275, %v1048
        %v1278 = vsel %vm943, %v1276, -inf
        %1279 = vmax.xlane.f32.xlu0 %v1278
        %v1280 = vpop.xlane.xlu0 %1279
        %v1281 = vsel %vm943, %v1277, -inf
        %1282 = vmax.xlane.f32.xlu0 %v1281
        %v1283 = vpop.xlane.xlu0 %1282
        %v1284 = vsub.f32 %v1276, %v1280
        %v1285 = vsub.f32 %v1277, %v1283
        %v1286 = vmul.f32 %v1284, 1.442695
        %v1287 = vpow.pop %v1286
        %v1288 = vmul.f32 %v1285, 1.442695
        %v1289 = vpow.pop %v1288
        %v1290 = vsel %vm943, %v1287, 0.0
        %1291 = vadd.xlane.f32.xlu0 %v1290
        %v1292 = vpop.xlane.xlu0 %1291
        %v1293 = vsel %vm943, %v1289, 0.0
        %1294 = vadd.xlane.f32.xlu0 %v1293
        %v1295 = vpop.xlane.xlu0 %1294
        %v1296 = vrcp.pop %v1292
        %v1297 = vrcp.pop %v1295
        %v1298 = vmul.f32 %v1287, %v1296
        %v1299 = vmul.f32 %v1289, %v1297
        %v1300 = vpack.c.bf16 %v1298, %v1298
        %v1301 = vpack.c.bf16 %v1299, %v1299
        %1302 = vrot.lane.b32.xlu0 %v938, 56
        %v1303 = vpop.permute.xlu0 %1302
        %v1305 = vsel %vm943, %v1300, 0
        %v1308 = vsel %vm1082, %v1303, 0
        %1310 = vmatprep.subr.bf16.mxu0 0
        %1311 = vmatpush1.bf16.msra.mxu0 0
        %1312 = vmatprep.subr.bf16.mxu0 0
        %1313 = vmatpush1.bf16.msra.mxu0 0
        %1314 = vmatprep.subr.bf16.mxu0 0
        %1315 = vmatpush1.bf16.msra.mxu0 0
        %1316 = vmatprep.subr.bf16.mxu0 0
        %1317 = vmatpush1.bf16.msra.mxu0 0
        %1318 = vmatprep.subr.bf16.mxu0 0
        %1319 = vmatpush1.bf16.msra.mxu0 0
        %1320 = vmatprep.subr.bf16.mxu0 0
        %1321 = vmatpush1.bf16.msra.mxu0 0
        %1322 = vmatprep.subr.bf16.mxu0 0
        %1323 = vmatpush1.bf16.msra.mxu0 0
        %1324 = vmatprep.subr.bf16.mxu0 0
        %1325 = vmatpush1.bf16.msra.mxu0 %v1308
        %1326 = vmatprep.subr.bf16.mxu0 0
        %1327 = vmatpush2.bf16.msra.mxu0 0
        %1328 = vmatprep.subr.bf16.mxu0 0
        %1329 = vmatpush2.bf16.msra.mxu0 0
        %1330 = vmatprep.subr.bf16.mxu0 0
        %1331 = vmatpush2.bf16.msra.mxu0 0
        %1332 = vmatprep.subr.bf16.mxu0 0
        %1333 = vmatpush2.bf16.msra.mxu0 0
        %1334 = vmatprep.subr.bf16.mxu0 0
        %1335 = vmatpush2.bf16.msra.mxu0 0
        %1336 = vmatprep.subr.bf16.mxu0 0
        %1337 = vmatpush2.bf16.msra.mxu0 0
        %1338 = vmatprep.subr.bf16.mxu0 0
        %1339 = vmatpush2.bf16.msra.mxu0 0
        %1340 = vmatprep.subr.bf16.mxu0 0
        %1341 = vmatpush2.bf16.msra.mxu0 0
        %1342 = vmatprep.mubr.bf16.mxu0 0
        %1343 = vmatmul.mubr.bf16.gmra.mxu0 %v1305
        %v1344 = vpop.f32.mrf.mxu0
        %v1345 = vadd.f32 0.0, %v1344
        %v1346 = vpop.f32.mrf.mxu0
        %v1347 = vpop.f32.mrf.mxu0
        %v1348 = vpop.f32.mrf.mxu0
        %1349 = vdwg.mxu0
        %1350 = vrot.lane.b32.xlu0 %v939, 56
        %v1351 = vpop.permute.xlu0 %1350
        %v1353 = vsel %vm943, %v1301, 0
        %v1356 = vsel %vm1082, %v1351, 0
        %1358 = vmatprep.subr.bf16.mxu0 0
        %1359 = vmatpush1.bf16.msra.mxu0 0
        %1360 = vmatprep.subr.bf16.mxu0 0
        %1361 = vmatpush1.bf16.msra.mxu0 0
        %1362 = vmatprep.subr.bf16.mxu0 0
        %1363 = vmatpush1.bf16.msra.mxu0 0
        %1364 = vmatprep.subr.bf16.mxu0 0
        %1365 = vmatpush1.bf16.msra.mxu0 0
        %1366 = vmatprep.subr.bf16.mxu0 0
        %1367 = vmatpush1.bf16.msra.mxu0 0
        %1368 = vmatprep.subr.bf16.mxu0 0
        %1369 = vmatpush1.bf16.msra.mxu0 0
        %1370 = vmatprep.subr.bf16.mxu0 0
        %1371 = vmatpush1.bf16.msra.mxu0 0
        %1372 = vmatprep.subr.bf16.mxu0 0
        %1373 = vmatpush1.bf16.msra.mxu0 %v1356
        %1374 = vmatprep.subr.bf16.mxu0 0
        %1375 = vmatpush2.bf16.msra.mxu0 0
        %1376 = vmatprep.subr.bf16.mxu0 0
        %1377 = vmatpush2.bf16.msra.mxu0 0
        %1378 = vmatprep.subr.bf16.mxu0 0
        %1379 = vmatpush2.bf16.msra.mxu0 0
        %1380 = vmatprep.subr.bf16.mxu0 0
        %1381 = vmatpush2.bf16.msra.mxu0 0
        %1382 = vmatprep.subr.bf16.mxu0 0
        %1383 = vmatpush2.bf16.msra.mxu0 0
        %1384 = vmatprep.subr.bf16.mxu0 0
        %1385 = vmatpush2.bf16.msra.mxu0 0
        %1386 = vmatprep.subr.bf16.mxu0 0
        %1387 = vmatpush2.bf16.msra.mxu0 0
        %1388 = vmatprep.subr.bf16.mxu0 0
        %1389 = vmatpush2.bf16.msra.mxu0 0
        %1390 = vmatprep.mubr.bf16.mxu0 0
        %1391 = vmatmul.mubr.bf16.gmra.mxu0 %v1353
        %v1392 = vpop.f32.mrf.mxu0
        %v1393 = vadd.f32 0.0, %v1392
        %v1394 = vpop.f32.mrf.mxu0
        %v1395 = vpop.f32.mrf.mxu0
        %v1396 = vpop.f32.mrf.mxu0
        %1397 = vdwg.mxu0
        %1398 = vrot.lane.b32.xlu0 %v938, 112
        %v1399 = vpop.permute.xlu0 %1398
        %1400 = vrot.lane.b32.xlu0 %v938, 80
        %v1401 = vpop.permute.xlu0 %1400
        %v1403 = vsel %vm943, %v1399, 0
        %v1406 = vsel %vm943, %v1401, 0
        %1408 = vmatprep.subr.bf16.mxu0 0
        %1409 = vmatpush1.bf16.xpose.msra.mxu0 0
        %1410 = vmatprep.subr.bf16.mxu0 0
        %1411 = vmatpush1.bf16.xpose.msra.mxu0 0
        %1412 = vmatprep.subr.bf16.mxu0 0
        %1413 = vmatpush1.bf16.xpose.msra.mxu0 0
        %1414 = vmatprep.subr.bf16.mxu0 0
        %1415 = vmatpush1.bf16.xpose.msra.mxu0 0
        %1416 = vmatprep.subr.bf16.mxu0 0
        %1417 = vmatpush1.bf16.xpose.msra.mxu0 0
        %1418 = vmatprep.subr.bf16.mxu0 0
        %1419 = vmatpush1.bf16.xpose.msra.mxu0 0
        %1420 = vmatprep.subr.bf16.mxu0 0
        %1421 = vmatpush1.bf16.xpose.msra.mxu0 0
        %1422 = vmatprep.subr.bf16.mxu0 0
        %1423 = vmatpush1.bf16.xpose.msra.mxu0 %v1406
        %1424 = vmatprep.subr.bf16.mxu0 0
        %1425 = vmatpush2.bf16.xpose.msra.mxu0 0
        %1426 = vmatprep.subr.bf16.mxu0 0
        %1427 = vmatpush2.bf16.xpose.msra.mxu0 0
        %1428 = vmatprep.subr.bf16.mxu0 0
        %1429 = vmatpush2.bf16.xpose.msra.mxu0 0
        %1430 = vmatprep.subr.bf16.mxu0 0
        %1431 = vmatpush2.bf16.xpose.msra.mxu0 0
        %1432 = vmatprep.subr.bf16.mxu0 0
        %1433 = vmatpush2.bf16.xpose.msra.mxu0 0
        %1434 = vmatprep.subr.bf16.mxu0 0
        %1435 = vmatpush2.bf16.xpose.msra.mxu0 0
        %1436 = vmatprep.subr.bf16.mxu0 0
        %1437 = vmatpush2.bf16.xpose.msra.mxu0 0
        %1438 = vmatprep.subr.bf16.mxu0 0
        %1439 = vmatpush2.bf16.xpose.msra.mxu0 0
        %1440 = vmatprep.mubr.bf16.mxu0 0
        %1441 = vmatmul.mubr.bf16.gmra.mxu0 %v1403
        %v1442 = vpop.f32.mrf.mxu0
        %v1443 = vadd.f32 0.0, %v1442
        %v1444 = vpop.f32.mrf.mxu0
        %v1445 = vpop.f32.mrf.mxu0
        %v1446 = vpop.f32.mrf.mxu0
        %1447 = vdwg.mxu0
        %1448 = vrot.lane.b32.xlu0 %v939, 112
        %v1449 = vpop.permute.xlu0 %1448
        %1450 = vrot.lane.b32.xlu0 %v939, 80
        %v1451 = vpop.permute.xlu0 %1450
        %v1453 = vsel %vm943, %v1449, 0
        %v1456 = vsel %vm943, %v1451, 0
        %1458 = vmatprep.subr.bf16.mxu0 0
        %1459 = vmatpush1.bf16.xpose.msra.mxu0 0
        %1460 = vmatprep.subr.bf16.mxu0 0
        %1461 = vmatpush1.bf16.xpose.msra.mxu0 0
        %1462 = vmatprep.subr.bf16.mxu0 0
        %1463 = vmatpush1.bf16.xpose.msra.mxu0 0
        %1464 = vmatprep.subr.bf16.mxu0 0
        %1465 = vmatpush1.bf16.xpose.msra.mxu0 0
        %1466 = vmatprep.subr.bf16.mxu0 0
        %1467 = vmatpush1.bf16.xpose.msra.mxu0 0
        %1468 = vmatprep.subr.bf16.mxu0 0
        %1469 = vmatpush1.bf16.xpose.msra.mxu0 0
        %1470 = vmatprep.subr.bf16.mxu0 0
        %1471 = vmatpush1.bf16.xpose.msra.mxu0 0
        %1472 = vmatprep.subr.bf16.mxu0 0
        %1473 = vmatpush1.bf16.xpose.msra.mxu0 %v1456
        %1474 = vmatprep.subr.bf16.mxu0 0
        %1475 = vmatpush2.bf16.xpose.msra.mxu0 0
        %1476 = vmatprep.subr.bf16.mxu0 0
        %1477 = vmatpush2.bf16.xpose.msra.mxu0 0
        %1478 = vmatprep.subr.bf16.mxu0 0
        %1479 = vmatpush2.bf16.xpose.msra.mxu0 0
        %1480 = vmatprep.subr.bf16.mxu0 0
        %1481 = vmatpush2.bf16.xpose.msra.mxu0 0
        %1482 = vmatprep.subr.bf16.mxu0 0
        %1483 = vmatpush2.bf16.xpose.msra.mxu0 0
        %1484 = vmatprep.subr.bf16.mxu0 0
        %1485 = vmatpush2.bf16.xpose.msra.mxu0 0
        %1486 = vmatprep.subr.bf16.mxu0 0
        %1487 = vmatpush2.bf16.xpose.msra.mxu0 0
        %1488 = vmatprep.subr.bf16.mxu0 0
        %1489 = vmatpush2.bf16.xpose.msra.mxu0 0
        %1490 = vmatprep.mubr.bf16.mxu0 0
        %1491 = vmatmul.mubr.bf16.gmra.mxu0 %v1453
        %v1492 = vpop.f32.mrf.mxu0
        %v1493 = vadd.f32 0.0, %v1492
        %v1494 = vpop.f32.mrf.mxu0
        %v1495 = vpop.f32.mrf.mxu0
        %v1496 = vpop.f32.mrf.mxu0
        %1497 = vdwg.mxu0
        %v1498 = vmul.f32 %v1443, 0.35355338
        %v1499 = vmul.f32 %v1493, 0.35355338
        %v1500 = vadd.f32 %v1498, %v1044
        %v1501 = vadd.f32 %v1499, %v1048
        %v1502 = vsel %vm943, %v1500, -inf
        %1503 = vmax.xlane.f32.xlu0 %v1502
        %v1504 = vpop.xlane.xlu0 %1503
        %v1505 = vsel %vm943, %v1501, -inf
        %1506 = vmax.xlane.f32.xlu0 %v1505
        %v1507 = vpop.xlane.xlu0 %1506
        %v1508 = vsub.f32 %v1500, %v1504
        %v1509 = vsub.f32 %v1501, %v1507
        %v1510 = vmul.f32 %v1508, 1.442695
        %v1511 = vpow.pop %v1510
        %v1512 = vmul.f32 %v1509, 1.442695
        %v1513 = vpow.pop %v1512
        %v1514 = vsel %vm943, %v1511, 0.0
        %1515 = vadd.xlane.f32.xlu0 %v1514
        %v1516 = vpop.xlane.xlu0 %1515
        %v1517 = vsel %vm943, %v1513, 0.0
        %1518 = vadd.xlane.f32.xlu0 %v1517
        %v1519 = vpop.xlane.xlu0 %1518
        %v1520 = vrcp.pop %v1516
        %v1521 = vrcp.pop %v1519
        %v1522 = vmul.f32 %v1511, %v1520
        %v1523 = vmul.f32 %v1513, %v1521
        %v1524 = vpack.c.bf16 %v1522, %v1522
        %v1525 = vpack.c.bf16 %v1523, %v1523
        %1526 = vrot.lane.b32.xlu0 %v938, 48
        %v1527 = vpop.permute.xlu0 %1526
        %v1529 = vsel %vm943, %v1524, 0
        %v1532 = vsel %vm1082, %v1527, 0
        %1534 = vmatprep.subr.bf16.mxu0 0
        %1535 = vmatpush1.bf16.msra.mxu0 0
        %1536 = vmatprep.subr.bf16.mxu0 0
        %1537 = vmatpush1.bf16.msra.mxu0 0
        %1538 = vmatprep.subr.bf16.mxu0 0
        %1539 = vmatpush1.bf16.msra.mxu0 0
        %1540 = vmatprep.subr.bf16.mxu0 0
        %1541 = vmatpush1.bf16.msra.mxu0 0
        %1542 = vmatprep.subr.bf16.mxu0 0
        %1543 = vmatpush1.bf16.msra.mxu0 0
        %1544 = vmatprep.subr.bf16.mxu0 0
        %1545 = vmatpush1.bf16.msra.mxu0 0
        %1546 = vmatprep.subr.bf16.mxu0 0
        %1547 = vmatpush1.bf16.msra.mxu0 0
        %1548 = vmatprep.subr.bf16.mxu0 0
        %1549 = vmatpush1.bf16.msra.mxu0 %v1532
        %1550 = vmatprep.subr.bf16.mxu0 0
        %1551 = vmatpush2.bf16.msra.mxu0 0
        %1552 = vmatprep.subr.bf16.mxu0 0
        %1553 = vmatpush2.bf16.msra.mxu0 0
        %1554 = vmatprep.subr.bf16.mxu0 0
        %1555 = vmatpush2.bf16.msra.mxu0 0
        %1556 = vmatprep.subr.bf16.mxu0 0
        %1557 = vmatpush2.bf16.msra.mxu0 0
        %1558 = vmatprep.subr.bf16.mxu0 0
        %1559 = vmatpush2.bf16.msra.mxu0 0
        %1560 = vmatprep.subr.bf16.mxu0 0
        %1561 = vmatpush2.bf16.msra.mxu0 0
        %1562 = vmatprep.subr.bf16.mxu0 0
        %1563 = vmatpush2.bf16.msra.mxu0 0
        %1564 = vmatprep.subr.bf16.mxu0 0
        %1565 = vmatpush2.bf16.msra.mxu0 0
        %1566 = vmatprep.mubr.bf16.mxu0 0
        %1567 = vmatmul.mubr.bf16.gmra.mxu0 %v1529
        %v1568 = vpop.f32.mrf.mxu0
        %v1569 = vadd.f32 0.0, %v1568
        %v1570 = vpop.f32.mrf.mxu0
        %v1571 = vpop.f32.mrf.mxu0
        %v1572 = vpop.f32.mrf.mxu0
        %1573 = vdwg.mxu0
        %1574 = vrot.lane.b32.xlu0 %v939, 48
        %v1575 = vpop.permute.xlu0 %1574
        %v1577 = vsel %vm943, %v1525, 0
        %v1580 = vsel %vm1082, %v1575, 0
        %1582 = vmatprep.subr.bf16.mxu0 0
        %1583 = vmatpush1.bf16.msra.mxu0 0
        %1584 = vmatprep.subr.bf16.mxu0 0
        %1585 = vmatpush1.bf16.msra.mxu0 0
        %1586 = vmatprep.subr.bf16.mxu0 0
        %1587 = vmatpush1.bf16.msra.mxu0 0
        %1588 = vmatprep.subr.bf16.mxu0 0
        %1589 = vmatpush1.bf16.msra.mxu0 0
        %1590 = vmatprep.subr.bf16.mxu0 0
        %1591 = vmatpush1.bf16.msra.mxu0 0
        %1592 = vmatprep.subr.bf16.mxu0 0
        %1593 = vmatpush1.bf16.msra.mxu0 0
        %1594 = vmatprep.subr.bf16.mxu0 0
        %1595 = vmatpush1.bf16.msra.mxu0 0
        %1596 = vmatprep.subr.bf16.mxu0 0
        %1597 = vmatpush1.bf16.msra.mxu0 %v1580
        %1598 = vmatprep.subr.bf16.mxu0 0
        %1599 = vmatpush2.bf16.msra.mxu0 0
        %1600 = vmatprep.subr.bf16.mxu0 0
        %1601 = vmatpush2.bf16.msra.mxu0 0
        %1602 = vmatprep.subr.bf16.mxu0 0
        %1603 = vmatpush2.bf16.msra.mxu0 0
        %1604 = vmatprep.subr.bf16.mxu0 0
        %1605 = vmatpush2.bf16.msra.mxu0 0
        %1606 = vmatprep.subr.bf16.mxu0 0
        %1607 = vmatpush2.bf16.msra.mxu0 0
        %1608 = vmatprep.subr.bf16.mxu0 0
        %1609 = vmatpush2.bf16.msra.mxu0 0
        %1610 = vmatprep.subr.bf16.mxu0 0
        %1611 = vmatpush2.bf16.msra.mxu0 0
        %1612 = vmatprep.subr.bf16.mxu0 0
        %1613 = vmatpush2.bf16.msra.mxu0 0
        %1614 = vmatprep.mubr.bf16.mxu0 0
        %1615 = vmatmul.mubr.bf16.gmra.mxu0 %v1577
        %v1616 = vpop.f32.mrf.mxu0
        %v1617 = vadd.f32 0.0, %v1616
        %v1618 = vpop.f32.mrf.mxu0
        %v1619 = vpop.f32.mrf.mxu0
        %v1620 = vpop.f32.mrf.mxu0
        %1621 = vdwg.mxu0
        %1622 = vrot.lane.b32.xlu0 %v938, 104
        %v1623 = vpop.permute.xlu0 %1622
        %1624 = vrot.lane.b32.xlu0 %v938, 72
        %v1625 = vpop.permute.xlu0 %1624
        %v1627 = vsel %vm943, %v1623, 0
        %v1630 = vsel %vm943, %v1625, 0
        %1632 = vmatprep.subr.bf16.mxu0 0
        %1633 = vmatpush1.bf16.xpose.msra.mxu0 0
        %1634 = vmatprep.subr.bf16.mxu0 0
        %1635 = vmatpush1.bf16.xpose.msra.mxu0 0
        %1636 = vmatprep.subr.bf16.mxu0 0
        %1637 = vmatpush1.bf16.xpose.msra.mxu0 0
        %1638 = vmatprep.subr.bf16.mxu0 0
        %1639 = vmatpush1.bf16.xpose.msra.mxu0 0
        %1640 = vmatprep.subr.bf16.mxu0 0
        %1641 = vmatpush1.bf16.xpose.msra.mxu0 0
        %1642 = vmatprep.subr.bf16.mxu0 0
        %1643 = vmatpush1.bf16.xpose.msra.mxu0 0
        %1644 = vmatprep.subr.bf16.mxu0 0
        %1645 = vmatpush1.bf16.xpose.msra.mxu0 0
        %1646 = vmatprep.subr.bf16.mxu0 0
        %1647 = vmatpush1.bf16.xpose.msra.mxu0 %v1630
        %1648 = vmatprep.subr.bf16.mxu0 0
        %1649 = vmatpush2.bf16.xpose.msra.mxu0 0
        %1650 = vmatprep.subr.bf16.mxu0 0
        %1651 = vmatpush2.bf16.xpose.msra.mxu0 0
        %1652 = vmatprep.subr.bf16.mxu0 0
        %1653 = vmatpush2.bf16.xpose.msra.mxu0 0
        %1654 = vmatprep.subr.bf16.mxu0 0
        %1655 = vmatpush2.bf16.xpose.msra.mxu0 0
        %1656 = vmatprep.subr.bf16.mxu0 0
        %1657 = vmatpush2.bf16.xpose.msra.mxu0 0
        %1658 = vmatprep.subr.bf16.mxu0 0
        %1659 = vmatpush2.bf16.xpose.msra.mxu0 0
        %1660 = vmatprep.subr.bf16.mxu0 0
        %1661 = vmatpush2.bf16.xpose.msra.mxu0 0
        %1662 = vmatprep.subr.bf16.mxu0 0
        %1663 = vmatpush2.bf16.xpose.msra.mxu0 0
        %1664 = vmatprep.mubr.bf16.mxu0 0
        %1665 = vmatmul.mubr.bf16.gmra.mxu0 %v1627
        %v1666 = vpop.f32.mrf.mxu0
        %v1667 = vadd.f32 0.0, %v1666
        %v1668 = vpop.f32.mrf.mxu0
        %v1669 = vpop.f32.mrf.mxu0
        %v1670 = vpop.f32.mrf.mxu0
        %1671 = vdwg.mxu0
        %1672 = vrot.lane.b32.xlu0 %v939, 104
        %v1673 = vpop.permute.xlu0 %1672
        %1674 = vrot.lane.b32.xlu0 %v939, 72
        %v1675 = vpop.permute.xlu0 %1674
        %v1677 = vsel %vm943, %v1673, 0
        %v1680 = vsel %vm943, %v1675, 0
        %1682 = vmatprep.subr.bf16.mxu0 0
        %1683 = vmatpush1.bf16.xpose.msra.mxu0 0
        %1684 = vmatprep.subr.bf16.mxu0 0
        %1685 = vmatpush1.bf16.xpose.msra.mxu0 0
        %1686 = vmatprep.subr.bf16.mxu0 0
        %1687 = vmatpush1.bf16.xpose.msra.mxu0 0
        %1688 = vmatprep.subr.bf16.mxu0 0
        %1689 = vmatpush1.bf16.xpose.msra.mxu0 0
        %1690 = vmatprep.subr.bf16.mxu0 0
        %1691 = vmatpush1.bf16.xpose.msra.mxu0 0
        %1692 = vmatprep.subr.bf16.mxu0 0
        %1693 = vmatpush1.bf16.xpose.msra.mxu0 0
        %1694 = vmatprep.subr.bf16.mxu0 0
        %1695 = vmatpush1.bf16.xpose.msra.mxu0 0
        %1696 = vmatprep.subr.bf16.mxu0 0
        %1697 = vmatpush1.bf16.xpose.msra.mxu0 %v1680
        %1698 = vmatprep.subr.bf16.mxu0 0
        %1699 = vmatpush2.bf16.xpose.msra.mxu0 0
        %1700 = vmatprep.subr.bf16.mxu0 0
        %1701 = vmatpush2.bf16.xpose.msra.mxu0 0
        %1702 = vmatprep.subr.bf16.mxu0 0
        %1703 = vmatpush2.bf16.xpose.msra.mxu0 0
        %1704 = vmatprep.subr.bf16.mxu0 0
        %1705 = vmatpush2.bf16.xpose.msra.mxu0 0
        %1706 = vmatprep.subr.bf16.mxu0 0
        %1707 = vmatpush2.bf16.xpose.msra.mxu0 0
        %1708 = vmatprep.subr.bf16.mxu0 0
        %1709 = vmatpush2.bf16.xpose.msra.mxu0 0
        %1710 = vmatprep.subr.bf16.mxu0 0
        %1711 = vmatpush2.bf16.xpose.msra.mxu0 0
        %1712 = vmatprep.subr.bf16.mxu0 0
        %1713 = vmatpush2.bf16.xpose.msra.mxu0 0
        %1714 = vmatprep.mubr.bf16.mxu0 0
        %1715 = vmatmul.mubr.bf16.gmra.mxu0 %v1677
        %v1716 = vpop.f32.mrf.mxu0
        %v1717 = vadd.f32 0.0, %v1716
        %v1718 = vpop.f32.mrf.mxu0
        %v1719 = vpop.f32.mrf.mxu0
        %v1720 = vpop.f32.mrf.mxu0
        %1721 = vdwg.mxu0
        %v1722 = vmul.f32 %v1667, 0.35355338
        %v1723 = vmul.f32 %v1717, 0.35355338
        %v1724 = vadd.f32 %v1722, %v1044
        %v1725 = vadd.f32 %v1723, %v1048
        %v1726 = vsel %vm943, %v1724, -inf
        %1727 = vmax.xlane.f32.xlu0 %v1726
        %v1728 = vpop.xlane.xlu0 %1727
        %v1729 = vsel %vm943, %v1725, -inf
        %1730 = vmax.xlane.f32.xlu0 %v1729
        %v1731 = vpop.xlane.xlu0 %1730
        %v1732 = vsub.f32 %v1724, %v1728
        %v1733 = vsub.f32 %v1725, %v1731
        %v1734 = vmul.f32 %v1732, 1.442695
        %v1735 = vpow.pop %v1734
        %v1736 = vmul.f32 %v1733, 1.442695
        %v1737 = vpow.pop %v1736
        %v1738 = vsel %vm943, %v1735, 0.0
        %1739 = vadd.xlane.f32.xlu0 %v1738
        %v1740 = vpop.xlane.xlu0 %1739
        %v1741 = vsel %vm943, %v1737, 0.0
        %1742 = vadd.xlane.f32.xlu0 %v1741
        %v1743 = vpop.xlane.xlu0 %1742
        %v1744 = vrcp.pop %v1740
        %v1745 = vrcp.pop %v1743
        %v1746 = vmul.f32 %v1735, %v1744
        %v1747 = vmul.f32 %v1737, %v1745
        %v1748 = vpack.c.bf16 %v1746, %v1746
        %v1749 = vpack.c.bf16 %v1747, %v1747
        %1750 = vrot.lane.b32.xlu0 %v938, 40
        %v1751 = vpop.permute.xlu0 %1750
        %v1753 = vsel %vm943, %v1748, 0
        %v1756 = vsel %vm1082, %v1751, 0
        %1758 = vmatprep.subr.bf16.mxu0 0
        %1759 = vmatpush1.bf16.msra.mxu0 0
        %1760 = vmatprep.subr.bf16.mxu0 0
        %1761 = vmatpush1.bf16.msra.mxu0 0
        %1762 = vmatprep.subr.bf16.mxu0 0
        %1763 = vmatpush1.bf16.msra.mxu0 0
        %1764 = vmatprep.subr.bf16.mxu0 0
        %1765 = vmatpush1.bf16.msra.mxu0 0
        %1766 = vmatprep.subr.bf16.mxu0 0
        %1767 = vmatpush1.bf16.msra.mxu0 0
        %1768 = vmatprep.subr.bf16.mxu0 0
        %1769 = vmatpush1.bf16.msra.mxu0 0
        %1770 = vmatprep.subr.bf16.mxu0 0
        %1771 = vmatpush1.bf16.msra.mxu0 0
        %1772 = vmatprep.subr.bf16.mxu0 0
        %1773 = vmatpush1.bf16.msra.mxu0 %v1756
        %1774 = vmatprep.subr.bf16.mxu0 0
        %1775 = vmatpush2.bf16.msra.mxu0 0
        %1776 = vmatprep.subr.bf16.mxu0 0
        %1777 = vmatpush2.bf16.msra.mxu0 0
        %1778 = vmatprep.subr.bf16.mxu0 0
        %1779 = vmatpush2.bf16.msra.mxu0 0
        %1780 = vmatprep.subr.bf16.mxu0 0
        %1781 = vmatpush2.bf16.msra.mxu0 0
        %1782 = vmatprep.subr.bf16.mxu0 0
        %1783 = vmatpush2.bf16.msra.mxu0 0
        %1784 = vmatprep.subr.bf16.mxu0 0
        %1785 = vmatpush2.bf16.msra.mxu0 0
        %1786 = vmatprep.subr.bf16.mxu0 0
        %1787 = vmatpush2.bf16.msra.mxu0 0
        %1788 = vmatprep.subr.bf16.mxu0 0
        %1789 = vmatpush2.bf16.msra.mxu0 0
        %1790 = vmatprep.mubr.bf16.mxu0 0
        %1791 = vmatmul.mubr.bf16.gmra.mxu0 %v1753
        %v1792 = vpop.f32.mrf.mxu0
        %v1793 = vadd.f32 0.0, %v1792
        %v1794 = vpop.f32.mrf.mxu0
        %v1795 = vpop.f32.mrf.mxu0
        %v1796 = vpop.f32.mrf.mxu0
        %1797 = vdwg.mxu0
        %1798 = vrot.lane.b32.xlu0 %v939, 40
        %v1799 = vpop.permute.xlu0 %1798
        %v1801 = vsel %vm943, %v1749, 0
        %v1804 = vsel %vm1082, %v1799, 0
        %1806 = vmatprep.subr.bf16.mxu0 0
        %1807 = vmatpush1.bf16.msra.mxu0 0
        %1808 = vmatprep.subr.bf16.mxu0 0
        %1809 = vmatpush1.bf16.msra.mxu0 0
        %1810 = vmatprep.subr.bf16.mxu0 0
        %1811 = vmatpush1.bf16.msra.mxu0 0
        %1812 = vmatprep.subr.bf16.mxu0 0
        %1813 = vmatpush1.bf16.msra.mxu0 0
        %1814 = vmatprep.subr.bf16.mxu0 0
        %1815 = vmatpush1.bf16.msra.mxu0 0
        %1816 = vmatprep.subr.bf16.mxu0 0
        %1817 = vmatpush1.bf16.msra.mxu0 0
        %1818 = vmatprep.subr.bf16.mxu0 0
        %1819 = vmatpush1.bf16.msra.mxu0 0
        %1820 = vmatprep.subr.bf16.mxu0 0
        %1821 = vmatpush1.bf16.msra.mxu0 %v1804
        %1822 = vmatprep.subr.bf16.mxu0 0
        %1823 = vmatpush2.bf16.msra.mxu0 0
        %1824 = vmatprep.subr.bf16.mxu0 0
        %1825 = vmatpush2.bf16.msra.mxu0 0
        %1826 = vmatprep.subr.bf16.mxu0 0
        %1827 = vmatpush2.bf16.msra.mxu0 0
        %1828 = vmatprep.subr.bf16.mxu0 0
        %1829 = vmatpush2.bf16.msra.mxu0 0
        %1830 = vmatprep.subr.bf16.mxu0 0
        %1831 = vmatpush2.bf16.msra.mxu0 0
        %1832 = vmatprep.subr.bf16.mxu0 0
        %1833 = vmatpush2.bf16.msra.mxu0 0
        %1834 = vmatprep.subr.bf16.mxu0 0
        %1835 = vmatpush2.bf16.msra.mxu0 0
        %1836 = vmatprep.subr.bf16.mxu0 0
        %1837 = vmatpush2.bf16.msra.mxu0 0
        %1838 = vmatprep.mubr.bf16.mxu0 0
        %1839 = vmatmul.mubr.bf16.gmra.mxu0 %v1801
        %v1840 = vpop.f32.mrf.mxu0
        %v1841 = vadd.f32 0.0, %v1840
        %v1842 = vpop.f32.mrf.mxu0
        %v1843 = vpop.f32.mrf.mxu0
        %v1844 = vpop.f32.mrf.mxu0
        %1845 = vdwg.mxu0
        %1848 = vrot.lane.b32.xlu0 %v1345, 8
        %v1849 = vpop.permute.xlu0 %1848
        %1850 = vrot.lane.b32.xlu0 %v1393, 8
        %v1851 = vpop.permute.xlu0 %1850
        %1856 = vrot.lane.b32.xlu0 %v1569, 16
        %v1857 = vpop.permute.xlu0 %1856
        %1858 = vrot.lane.b32.xlu0 %v1617, 16
        %v1859 = vpop.permute.xlu0 %1858
        %1864 = vrot.lane.b32.xlu0 %v1793, 24
        %v1865 = vpop.permute.xlu0 %1864
        %1866 = vrot.lane.b32.xlu0 %v1841, 24
        %v1867 = vpop.permute.xlu0 %1866
        %v1870 = vsel %vm943, %v1121, %v1849
        %v1871 = vsel %vm943, %v1169, %v1851
        %vm1872 = vcmask 130048
        %v1873 = vsel %vm1872, %v1870, %v1857
        %v1874 = vsel %vm1872, %v1871, %v1859
        %vm1875 = vcmask 195584
        %v1876 = vsel %vm1875, %v1873, %v1865
        %v1877 = vsel %vm1875, %v1874, %v1867
        %v1878 = vld [vmem:[%s756] sm:$0xf]
        %v1879 = vld [vmem:[%s756 + $0x4] sm:$0xf]
        %v1880 = vld [vmem:[%s756 + $0x8] sm:$0xf]
        %v1881 = vld [vmem:[%s756 + $0xc] sm:$0xf]
        %v1882 = vpack.c.bf16 %v1877, %v1876
        %v1883 = vld [vmem:[%s759] sm:$0x1]
        %v1885 = vlaneseq
        %v1886 = vshrl.u32 %v1885, 7
        %v1887 = vsub.s32 0, %v1886
        %v1888 = vrot.slane %v1883, %v1887
        %v1894 = vunpack.c.l.b16 %v1878
        %v1895 = vunpack.c.l.b16 %v1879
        %v1896 = vunpack.c.l.b16 %v1880
        %v1897 = vunpack.c.l.b16 %v1881
        %v1898 = vpack.c.b16 %v1895, %v1894
        %v1899 = vpack.c.b16 %v1897, %v1896
        %v1903 = vsel %vm869, %v1882, 0
        %1905 = vmatprep.subr.bf16.mxu0 0
        %1906 = vmatpush1.bf16.msra.mxu0 0
        %1907 = vmatprep.subr.bf16.mxu0 0
        %1908 = vmatpush1.bf16.msra.mxu0 0
        %1909 = vmatprep.subr.bf16.mxu0 0
        %1910 = vmatpush1.bf16.msra.mxu0 0
        %1911 = vmatprep.subr.bf16.mxu0 0
        %1912 = vmatpush1.bf16.msra.mxu0 0
        %1913 = vmatprep.subr.bf16.mxu0 0
        %1914 = vmatpush1.bf16.msra.mxu0 0
        %1915 = vmatprep.subr.bf16.mxu0 0
        %1916 = vmatpush1.bf16.msra.mxu0 0
        %1917 = vmatprep.subr.bf16.mxu0 0
        %1918 = vmatpush1.bf16.msra.mxu0 %v1899
        %1919 = vmatprep.subr.bf16.mxu0 0
        %1920 = vmatpush1.bf16.msra.mxu0 %v1898
        %1921 = vmatprep.subr.bf16.mxu0 0
        %1922 = vmatpush2.bf16.msra.mxu0 0
        %1923 = vmatprep.subr.bf16.mxu0 0
        %1924 = vmatpush2.bf16.msra.mxu0 0
        %1925 = vmatprep.subr.bf16.mxu0 0
        %1926 = vmatpush2.bf16.msra.mxu0 0
        %1927 = vmatprep.subr.bf16.mxu0 0
        %1928 = vmatpush2.bf16.msra.mxu0 0
        %1929 = vmatprep.subr.bf16.mxu0 0
        %1930 = vmatpush2.bf16.msra.mxu0 0
        %1931 = vmatprep.subr.bf16.mxu0 0
        %1932 = vmatpush2.bf16.msra.mxu0 0
        %1933 = vmatprep.subr.bf16.mxu0 0
        %1934 = vmatpush2.bf16.msra.mxu0 0
        %1935 = vmatprep.subr.bf16.mxu0 0
        %1936 = vmatpush2.bf16.msra.mxu0 0
        %1937 = vmatprep.mubr.bf16.mxu0 0
        %1938 = vmatmul.mubr.bf16.gmra.mxu0 %v1903
        %v1939 = vpop.f32.mrf.mxu0
        %v1940 = vadd.f32 %v1888, %v1939
        %v1941 = vpop.f32.mrf.mxu0
        %v1942 = vpop.f32.mrf.mxu0
        %v1943 = vadd.f32 %v1888, %v1942
        %v1944 = vpop.f32.mrf.mxu0
        %1945 = vdwg.mxu0
        %v1946 = vadd.f32 %v1940, %v843
        %v1947 = vadd.f32 %v1943, %v844
        %v1948 = vld [vmem:[%s762] sm:$0x1]
        %v1949 = vld [vmem:[%s765] sm:$0x1]
        %v1950 = vsel %vm869, %v1946, 0.0
        %1951 = vadd.xlane.f32.xlu0 %v1950
        %v1952 = vpop.xlane.xlu0 %1951
        %v1953 = vsel %vm869, %v1947, 0.0
        %1954 = vadd.xlane.f32.xlu0 %v1953
        %v1955 = vpop.xlane.xlu0 %1954
        %v1956 = vrcp.pop 32.0
        %v1957 = vmul.f32 %v1952, %v1956
        %v1958 = vmul.f32 %v1955, %v1956
        %v1959 = vsub.f32 %v1946, %v1957
        %v1960 = vsub.f32 %v1947, %v1958
        %v1961 = vmul.f32 %v1959, %v1959
        %v1962 = vmul.f32 %v1960, %v1960
        %v1963 = vsel %vm869, %v1961, 0.0
        %1964 = vadd.xlane.f32.xlu0 %v1963
        %v1965 = vpop.xlane.xlu0 %1964
        %v1966 = vsel %vm869, %v1962, 0.0
        %1967 = vadd.xlane.f32.xlu0 %v1966
        %v1968 = vpop.xlane.xlu0 %1967
        %v1969 = vmul.f32 %v1965, %v1956
        %v1970 = vmul.f32 %v1968, %v1956
        %v1971 = vadd.f32 %v1969, 1e-12
        %v1972 = vadd.f32 %v1970, 1e-12
        %v1973 = vrsqrt.pop %v1971
        %v1974 = vrsqrt.pop %v1972
        %v1975 = vmul.f32 %v1959, %v1973
        %v1976 = vmul.f32 %v1960, %v1974
        %v1978 = vlaneseq
        %v1979 = vshrl.u32 %v1978, 7
        %v1980 = vsub.s32 0, %v1979
        %v1981 = vrot.slane %v1948, %v1980
        %v1983 = vmul.f32 %v1975, %v1981
        %v1984 = vmul.f32 %v1976, %v1981
        %v1986 = vlaneseq
        %v1987 = vshrl.u32 %v1986, 7
        %v1988 = vsub.s32 0, %v1987
        %v1989 = vrot.slane %v1949, %v1988
        %v1991 = vadd.f32 %v1983, %v1989
        %v1992 = vadd.f32 %v1984, %v1989
        %v1993 = vld [vmem:[%s770] sm:$0xf]
        %v1994 = vld [vmem:[%s770 + $0x4] sm:$0xf]
        %v1995 = vld [vmem:[%s770 + $0x8] sm:$0xf]
        %v1996 = vld [vmem:[%s770 + $0xc] sm:$0xf]
        %v1997 = vpack.c.bf16 %v1992, %v1991
        %v1998 = vld [vmem:[%s773] sm:$0x1]
        %v2000 = vlaneseq
        %v2001 = vshrl.u32 %v2000, 7
        %v2002 = vsub.s32 0, %v2001
        %v2003 = vrot.slane %v1998, %v2002
        %v2009 = vunpack.c.l.b16 %v1993
        %v2010 = vunpack.c.l.b16 %v1994
        %v2011 = vunpack.c.l.b16 %v1995
        %v2012 = vunpack.c.l.b16 %v1996
        %v2013 = vpack.c.b16 %v2010, %v2009
        %v2014 = vpack.c.b16 %v2012, %v2011
        %v2018 = vsel %vm869, %v1997, 0
        %2020 = vmatprep.subr.bf16.mxu0 0
        %2021 = vmatpush1.bf16.msra.mxu0 0
        %2022 = vmatprep.subr.bf16.mxu0 0
        %2023 = vmatpush1.bf16.msra.mxu0 0
        %2024 = vmatprep.subr.bf16.mxu0 0
        %2025 = vmatpush1.bf16.msra.mxu0 0
        %2026 = vmatprep.subr.bf16.mxu0 0
        %2027 = vmatpush1.bf16.msra.mxu0 0
        %2028 = vmatprep.subr.bf16.mxu0 0
        %2029 = vmatpush1.bf16.msra.mxu0 0
        %2030 = vmatprep.subr.bf16.mxu0 0
        %2031 = vmatpush1.bf16.msra.mxu0 0
        %2032 = vmatprep.subr.bf16.mxu0 0
        %2033 = vmatpush1.bf16.msra.mxu0 %v2014
        %2034 = vmatprep.subr.bf16.mxu0 0
        %2035 = vmatpush1.bf16.msra.mxu0 %v2013
        %2036 = vmatprep.subr.bf16.mxu0 0
        %2037 = vmatpush2.bf16.msra.mxu0 0
        %2038 = vmatprep.subr.bf16.mxu0 0
        %2039 = vmatpush2.bf16.msra.mxu0 0
        %2040 = vmatprep.subr.bf16.mxu0 0
        %2041 = vmatpush2.bf16.msra.mxu0 0
        %2042 = vmatprep.subr.bf16.mxu0 0
        %2043 = vmatpush2.bf16.msra.mxu0 0
        %2044 = vmatprep.subr.bf16.mxu0 0
        %2045 = vmatpush2.bf16.msra.mxu0 0
        %2046 = vmatprep.subr.bf16.mxu0 0
        %2047 = vmatpush2.bf16.msra.mxu0 0
        %2048 = vmatprep.subr.bf16.mxu0 0
        %2049 = vmatpush2.bf16.msra.mxu0 0
        %2050 = vmatprep.subr.bf16.mxu0 0
        %2051 = vmatpush2.bf16.msra.mxu0 0
        %2052 = vmatprep.mubr.bf16.mxu0 0
        %2053 = vmatmul.mubr.bf16.gmra.mxu0 %v2018
        %v2054 = vpop.f32.mrf.mxu0
        %v2055 = vadd.f32 %v2003, %v2054
        %v2056 = vpop.f32.mrf.mxu0
        %v2057 = vpop.f32.mrf.mxu0
        %v2058 = vadd.f32 %v2003, %v2057
        %v2059 = vpop.f32.mrf.mxu0
        %2060 = vdwg.mxu0
        %v2061 = vmul.f32 %v2055, %v2055
        %v2062 = vmul.f32 %v2058, %v2058
        %v2063 = vmul.f32 %v2055, %v2061
        %v2064 = vmul.f32 %v2058, %v2062
        %v2065 = vmul.f32 %v2063, 0.044715
        %v2066 = vmul.f32 %v2064, 0.044715
        %v2067 = vadd.f32 %v2055, %v2065
        %v2068 = vadd.f32 %v2058, %v2066
        %v2069 = vmul.f32 %v2067, 0.7978846
        %v2070 = vmul.f32 %v2068, 0.7978846
        %v2071 = vtanh.pop %v2069
        %v2072 = vtanh.pop %v2070
        %v2073 = vadd.f32 %v2071, 1.0
        %v2074 = vadd.f32 %v2072, 1.0
        %v2075 = vmul.f32 %v2073, 0.5
        %v2076 = vmul.f32 %v2074, 0.5
        %v2077 = vmul.f32 %v2055, %v2075
        %v2078 = vmul.f32 %v2058, %v2076
        %v2079 = vld [vmem:[%s778] sm:$0xf]
        %v2080 = vld [vmem:[%s778 + $0x4] sm:$0xf]
        %v2081 = vld [vmem:[%s778 + $0x8] sm:$0xf]
        %v2082 = vld [vmem:[%s778 + $0xc] sm:$0xf]
        %v2083 = vld [vmem:[%s778 + $0x10] sm:$0xf]
        %v2084 = vld [vmem:[%s778 + $0x14] sm:$0xf]
        %v2085 = vld [vmem:[%s778 + $0x18] sm:$0xf]
        %v2086 = vld [vmem:[%s778 + $0x1c] sm:$0xf]
        %v2087 = vld [vmem:[%s778 + $0x20] sm:$0xf]
        %v2088 = vld [vmem:[%s778 + $0x24] sm:$0xf]
        %v2089 = vld [vmem:[%s778 + $0x28] sm:$0xf]
        %v2090 = vld [vmem:[%s778 + $0x2c] sm:$0xf]
        %v2091 = vld [vmem:[%s778 + $0x30] sm:$0xf]
        %v2092 = vld [vmem:[%s778 + $0x34] sm:$0xf]
        %v2093 = vld [vmem:[%s778 + $0x38] sm:$0xf]
        %v2094 = vld [vmem:[%s778 + $0x3c] sm:$0xf]
        %v2095 = vpack.c.bf16 %v2078, %v2077
        %v2096 = vld [vmem:[%s781] sm:$0x1]
        %v2098 = vlaneseq
        %v2099 = vshrl.u32 %v2098, 7
        %v2100 = vsub.s32 0, %v2099
        %v2101 = vrot.slane %v2096, %v2100
        %v2119 = vunpack.c.l.b16 %v2079
        %v2120 = vunpack.c.l.b16 %v2080
        %v2121 = vunpack.c.l.b16 %v2081
        %v2122 = vunpack.c.l.b16 %v2082
        %v2123 = vunpack.c.l.b16 %v2083
        %v2124 = vunpack.c.l.b16 %v2084
        %v2125 = vunpack.c.l.b16 %v2085
        %v2126 = vunpack.c.l.b16 %v2086
        %v2127 = vunpack.c.l.b16 %v2087
        %v2128 = vunpack.c.l.b16 %v2088
        %v2129 = vunpack.c.l.b16 %v2089
        %v2130 = vunpack.c.l.b16 %v2090
        %v2131 = vunpack.c.l.b16 %v2091
        %v2132 = vunpack.c.l.b16 %v2092
        %v2133 = vunpack.c.l.b16 %v2093
        %v2134 = vunpack.c.l.b16 %v2094
        %v2135 = vpack.c.b16 %v2120, %v2119
        %v2136 = vpack.c.b16 %v2122, %v2121
        %v2137 = vpack.c.b16 %v2124, %v2123
        %v2138 = vpack.c.b16 %v2126, %v2125
        %v2139 = vpack.c.b16 %v2128, %v2127
        %v2140 = vpack.c.b16 %v2130, %v2129
        %v2141 = vpack.c.b16 %v2132, %v2131
        %v2142 = vpack.c.b16 %v2134, %v2133
        %2151 = vmatprep.subr.bf16.mxu0 0
        %2152 = vmatpush1.bf16.msra.mxu0 %v2142
        %2153 = vmatprep.subr.bf16.mxu0 0
        %2154 = vmatpush1.bf16.msra.mxu0 %v2141
        %2155 = vmatprep.subr.bf16.mxu0 0
        %2156 = vmatpush1.bf16.msra.mxu0 %v2140
        %2157 = vmatprep.subr.bf16.mxu0 0
        %2158 = vmatpush1.bf16.msra.mxu0 %v2139
        %2159 = vmatprep.subr.bf16.mxu0 0
        %2160 = vmatpush1.bf16.msra.mxu0 %v2138
        %2161 = vmatprep.subr.bf16.mxu0 0
        %2162 = vmatpush1.bf16.msra.mxu0 %v2137
        %2163 = vmatprep.subr.bf16.mxu0 0
        %2164 = vmatpush1.bf16.msra.mxu0 %v2136
        %2165 = vmatprep.subr.bf16.mxu0 0
        %2166 = vmatpush1.bf16.msra.mxu0 %v2135
        %2167 = vmatprep.subr.bf16.mxu0 0
        %2168 = vmatpush2.bf16.msra.mxu0 0
        %2169 = vmatprep.subr.bf16.mxu0 0
        %2170 = vmatpush2.bf16.msra.mxu0 0
        %2171 = vmatprep.subr.bf16.mxu0 0
        %2172 = vmatpush2.bf16.msra.mxu0 0
        %2173 = vmatprep.subr.bf16.mxu0 0
        %2174 = vmatpush2.bf16.msra.mxu0 0
        %2175 = vmatprep.subr.bf16.mxu0 0
        %2176 = vmatpush2.bf16.msra.mxu0 0
        %2177 = vmatprep.subr.bf16.mxu0 0
        %2178 = vmatpush2.bf16.msra.mxu0 0
        %2179 = vmatprep.subr.bf16.mxu0 0
        %2180 = vmatpush2.bf16.msra.mxu0 0
        %2181 = vmatprep.subr.bf16.mxu0 0
        %2182 = vmatpush2.bf16.msra.mxu0 0
        %2183 = vmatprep.mubr.bf16.mxu0 0
        %2184 = vmatmul.mubr.bf16.gmra.mxu0 %v2095
        %v2185 = vpop.f32.mrf.mxu0
        %v2186 = vadd.f32 %v2101, %v2185
        %v2187 = vpop.f32.mrf.mxu0
        %v2188 = vpop.f32.mrf.mxu0
        %v2189 = vadd.f32 %v2101, %v2188
        %v2190 = vpop.f32.mrf.mxu0
        %2191 = vdwg.mxu0
        %v2192 = vadd.f32 %v2186, %v1991
        %v2193 = vadd.f32 %v2189, %v1992
        %v2194 = vld [vmem:[%s784] sm:$0x1]
        %v2195 = vld [vmem:[%s787] sm:$0x1]
        %v2196 = vsel %vm869, %v2192, 0.0
        %2197 = vadd.xlane.f32.xlu0 %v2196
        %v2198 = vpop.xlane.xlu0 %2197
        %v2199 = vsel %vm869, %v2193, 0.0
        %2200 = vadd.xlane.f32.xlu0 %v2199
        %v2201 = vpop.xlane.xlu0 %2200
        %v2202 = vmul.f32 %v2198, %v1956
        %v2203 = vmul.f32 %v2201, %v1956
        %v2204 = vsub.f32 %v2192, %v2202
        %v2205 = vsub.f32 %v2193, %v2203
        %v2206 = vmul.f32 %v2204, %v2204
        %v2207 = vmul.f32 %v2205, %v2205
        %v2208 = vsel %vm869, %v2206, 0.0
        %2209 = vadd.xlane.f32.xlu0 %v2208
        %v2210 = vpop.xlane.xlu0 %2209
        %v2211 = vsel %vm869, %v2207, 0.0
        %2212 = vadd.xlane.f32.xlu0 %v2211
        %v2213 = vpop.xlane.xlu0 %2212
        %v2214 = vmul.f32 %v2210, %v1956
        %v2215 = vmul.f32 %v2213, %v1956
        %v2216 = vadd.f32 %v2214, 1e-12
        %v2217 = vadd.f32 %v2215, 1e-12
        %v2218 = vrsqrt.pop %v2216
        %v2219 = vrsqrt.pop %v2217
        %v2220 = vmul.f32 %v2204, %v2218
        %v2221 = vmul.f32 %v2205, %v2219
        %v2223 = vlaneseq
        %v2224 = vshrl.u32 %v2223, 7
        %v2225 = vsub.s32 0, %v2224
        %v2226 = vrot.slane %v2194, %v2225
        %v2228 = vmul.f32 %v2220, %v2226
        %v2229 = vmul.f32 %v2221, %v2226
        %v2231 = vlaneseq
        %v2232 = vshrl.u32 %v2231, 7
        %v2233 = vsub.s32 0, %v2232
        %v2234 = vrot.slane %v2195, %v2233
        %v2236 = vadd.f32 %v2228, %v2234
        %v2237 = vadd.f32 %v2229, %v2234
        %2238 = vst.msk [vmem:[#allocation2] sm:$0xff] %vm869, %v2236
        %2239 = vst.msk [vmem:[#allocation2 + $0x8] sm:$0xff] %vm869, %v2237
        %p2240 = scmp.eq.s32.totalorder %s32, 1
        // Predicated region
        $region105: #{bert_class_forward.1} parent=99 // pred_check
          %p2241 = pneg %p2240
        $region106: #{bert_class_forward.1} parent=99 // pred_check_branch
          %2243 = sbr.rel (%p2241) target = $region108
        $region107: #{bert_class_forward.1} parent=99 // pred_region
          %v2245 = vrot.slane %v2237, 7
          %vm2247 = vcmask 1040384
          %v2248 = vsel %vm2247, %v2236, %v2245
          %v2249 = vld [vmem:[%s16] sm:$0xf]
          %v2250 = vld [vmem:[%s16 + $0x4] sm:$0xf]
          %v2251 = vld [vmem:[%s16 + $0x8] sm:$0xf]
          %v2252 = vld [vmem:[%s16 + $0xc] sm:$0xf]
          %v2253 = vpack.c.bf16 %v2248, %v2248
          %v2254 = vld [vmem:[%s17] sm:$0x1]
          %v2256 = vlaneseq
          %v2257 = vshrl.u32 %v2256, 7
          %v2258 = vsub.s32 0, %v2257
          %v2259 = vrot.slane %v2254, %v2258
          %v2265 = vunpack.c.l.b16 %v2249
          %v2266 = vunpack.c.l.b16 %v2250
          %v2267 = vunpack.c.l.b16 %v2251
          %v2268 = vunpack.c.l.b16 %v2252
          %v2269 = vpack.c.b16 %v2266, %v2265
          %v2270 = vpack.c.b16 %v2268, %v2267
          %v2274 = vsel %vm869, %v2253, 0
          %2276 = vmatprep.subr.bf16.mxu0 0
          %2277 = vmatpush1.bf16.msra.mxu0 0
          %2278 = vmatprep.subr.bf16.mxu0 0
          %2279 = vmatpush1.bf16.msra.mxu0 0
          %2280 = vmatprep.subr.bf16.mxu0 0
          %2281 = vmatpush1.bf16.msra.mxu0 0
          %2282 = vmatprep.subr.bf16.mxu0 0
          %2283 = vmatpush1.bf16.msra.mxu0 0
          %2284 = vmatprep.subr.bf16.mxu0 0
          %2285 = vmatpush1.bf16.msra.mxu0 0
          %2286 = vmatprep.subr.bf16.mxu0 0
          %2287 = vmatpush1.bf16.msra.mxu0 0
          %2288 = vmatprep.subr.bf16.mxu0 0
          %2289 = vmatpush1.bf16.msra.mxu0 %v2270
          %2290 = vmatprep.subr.bf16.mxu0 0
          %2291 = vmatpush1.bf16.msra.mxu0 %v2269
          %2292 = vmatprep.subr.bf16.mxu0 0
          %2293 = vmatpush2.bf16.msra.mxu0 0
          %2294 = vmatprep.subr.bf16.mxu0 0
          %2295 = vmatpush2.bf16.msra.mxu0 0
          %2296 = vmatprep.subr.bf16.mxu0 0
          %2297 = vmatpush2.bf16.msra.mxu0 0
          %2298 = vmatprep.subr.bf16.mxu0 0
          %2299 = vmatpush2.bf16.msra.mxu0 0
          %2300 = vmatprep.subr.bf16.mxu0 0
          %2301 = vmatpush2.bf16.msra.mxu0 0
          %2302 = vmatprep.subr.bf16.mxu0 0
          %2303 = vmatpush2.bf16.msra.mxu0 0
          %2304 = vmatprep.subr.bf16.mxu0 0
          %2305 = vmatpush2.bf16.msra.mxu0 0
          %2306 = vmatprep.subr.bf16.mxu0 0
          %2307 = vmatpush2.bf16.msra.mxu0 0
          %2308 = vmatprep.mubr.bf16.mxu0 0
          %2309 = vmatmul.mubr.bf16.gmra.mxu0 %v2274
          %v2310 = vpop.f32.mrf.mxu0
          %v2311 = vadd.f32 %v2259, %v2310
          %v2312 = vpop.f32.mrf.mxu0
          %v2313 = vpop.f32.mrf.mxu0
          %v2314 = vpop.f32.mrf.mxu0
          %2315 = vdwg.mxu0
          %v2316 = vtanh.pop %v2311
          %v2317 = vld [vmem:[%s18] sm:$0xf]
          %v2318 = vld [vmem:[%s18 + $0x4] sm:$0xf]
          %v2319 = vld [vmem:[%s18 + $0x8] sm:$0xf]
          %v2320 = vld [vmem:[%s18 + $0xc] sm:$0xf]
          %v2321 = vpack.c.bf16 %v2316, %v2316
          %v2322 = vld [vmem:[%s19] sm:$0x1]
          %v2324 = vlaneseq
          %v2325 = vshrl.u32 %v2324, 7
          %v2326 = vsub.s32 0, %v2325
          %v2327 = vrot.slane %v2322, %v2326
          %v2333 = vunpack.c.l.b16 %v2317
          %v2334 = vunpack.c.l.b16 %v2318
          %v2335 = vunpack.c.l.b16 %v2319
          %v2336 = vunpack.c.l.b16 %v2320
          %v2337 = vpack.c.b16 %v2334, %v2333
          %v2338 = vpack.c.b16 %v2336, %v2335
          %v2342 = vsel %vm869, %v2321, 0
          %2344 = vmatprep.subr.bf16.mxu0 0
          %2345 = vmatpush1.bf16.msra.mxu0 0
          %2346 = vmatprep.subr.bf16.mxu0 0
          %2347 = vmatpush1.bf16.msra.mxu0 0
          %2348 = vmatprep.subr.bf16.mxu0 0
          %2349 = vmatpush1.bf16.msra.mxu0 0
          %2350 = vmatprep.subr.bf16.mxu0 0
          %2351 = vmatpush1.bf16.msra.mxu0 0
          %2352 = vmatprep.subr.bf16.mxu0 0
          %2353 = vmatpush1.bf16.msra.mxu0 0
          %2354 = vmatprep.subr.bf16.mxu0 0
          %2355 = vmatpush1.bf16.msra.mxu0 0
          %2356 = vmatprep.subr.bf16.mxu0 0
          %2357 = vmatpush1.bf16.msra.mxu0 %v2338
          %2358 = vmatprep.subr.bf16.mxu0 0
          %2359 = vmatpush1.bf16.msra.mxu0 %v2337
          %2360 = vmatprep.subr.bf16.mxu0 0
          %2361 = vmatpush2.bf16.msra.mxu0 0
          %2362 = vmatprep.subr.bf16.mxu0 0
          %2363 = vmatpush2.bf16.msra.mxu0 0
          %2364 = vmatprep.subr.bf16.mxu0 0
          %2365 = vmatpush2.bf16.msra.mxu0 0
          %2366 = vmatprep.subr.bf16.mxu0 0
          %2367 = vmatpush2.bf16.msra.mxu0 0
          %2368 = vmatprep.subr.bf16.mxu0 0
          %2369 = vmatpush2.bf16.msra.mxu0 0
          %2370 = vmatprep.subr.bf16.mxu0 0
          %2371 = vmatpush2.bf16.msra.mxu0 0
          %2372 = vmatprep.subr.bf16.mxu0 0
          %2373 = vmatpush2.bf16.msra.mxu0 0
          %2374 = vmatprep.subr.bf16.mxu0 0
          %2375 = vmatpush2.bf16.msra.mxu0 0
          %2376 = vmatprep.mubr.bf16.mxu0 0
          %2377 = vmatmul.mubr.bf16.gmra.mxu0 %v2342
          %v2378 = vpop.f32.mrf.mxu0
          %v2379 = vadd.f32 %v2327, %v2378
          %v2380 = vpop.f32.mrf.mxu0
          %v2381 = vpop.f32.mrf.mxu0
          %v2382 = vpop.f32.mrf.mxu0
          %2383 = vdwg.mxu0
          %2384 = vst [vmem:[#allocation3] sm:$0x3] %v2379
        $region108: #{bert_class_forward.1} parent=99 // pred_fallthru
          _
        // Predicated region
        $region109: #{bert_class_forward.1} parent=99 // pred_check
          %p2385 = pneg %p525
        $region110: #{bert_class_forward.1} parent=99 // pred_check_branch
          %2387 = sbr.rel (%p2385) target = $region112
        $region111: #{bert_class_forward.1} parent=99 // pred_region
          %s2389 = ssub.s32 32, 32
          %2390 = vsyncadd [#allocation4], %s2389
          %s2392 = sshll.u32 [#allocation3], 4
          %s2393 = int_to_ptr.vmem [resolvable:$true] %s2392
          %2395 = dma.vmem_to_hbm [thread:$0]  %s2393, 32, %s20, [#allocation4]
        $region112: #{bert_class_forward.1} parent=99 // pred_fallthru
          _
        // Predicated region
        $region113: #{bert_class_forward.1} parent=99 // pred_check
          %p2396 = pneg %p525
        $region114: #{bert_class_forward.1} parent=99 // pred_check_branch
          %2398 = sbr.rel (%p2396) target = $region116
        $region115: #{bert_class_forward.1} parent=99 // pred_region
          %2399 = dma.done [#allocation4], 32
        $region116: #{bert_class_forward.1} parent=99 // pred_fallthru
          _
      $region100: #{bert_class_forward.1} parent=5 // pred_fallthru
        _
      %p2400 = scmp.le.s32.totalorder 2, %s27
      // Predicated region
      $region117: #{bert_class_forward.1} parent=5 // pred_check
        %p2401 = pneg %p2400
      $region118: #{bert_class_forward.1} parent=5 // pred_check_branch
        %2403 = sbr.rel (%p2401) target = $region120
      $region119: #{bert_class_forward.1} parent=5 // pred_region
        %s2404 = ssub.s32 %s27, 2
      $region120: #{bert_class_forward.1} parent=5 // pred_fallthru
        _
    $region6: #{bert_class_forward.1} parent=1 // loop_footer
      %s31 = sadd.s32 1, %s27
    $region7: #{bert_class_forward.1} parent=1 // loop_footer_branch
      %26 = sbr.rel target = $region3
    $region8: #{bert_class_forward.1} parent=1 // loop_exit
      _
    %2405 = vsyncpa [#allocation4], 1
    %s2406 = scalar_lea.sflag [#allocation4], 1
    %2407 = vsyncpa %s2406, 1

</llo_original>
